<compile_context>
chip_gen: v7x
topology: tpu7x:2x2x1
jax: 0.10.0
libtpu: 0.0.40
codegen_flags: <defaults>
</compile_context>

<pallas_src>
import math

import jax
import jax.numpy as jnp
from jax.experimental import pallas as pl
from jax.experimental.pallas import tpu as pltpu

_EPS = 1e-5
_BLUR_NORM = 64.0  # (1+3+3+1)**2 ; folded into the InstanceNorm eps (scale invariant)


def _vmem_limit_bytes():
    try:
        cap = pltpu.get_tpu_info().vmem_capacity_bytes
    except Exception:
        cap = 64 * 1024 * 1024
    return int(max(32 * 1024 * 1024, min(cap * 0.9, 128 * 1024 * 1024)))


def conv_blur_kernel(win_ref, w_ref, blur_ref, stats_ref):
    # win_ref  : (1, 1, TH+4, W+2, Cin)  bf16  padded-x rows [tS-1, tS+TH+2] (tS = t*TH)
    # w_ref    : (4, 4*Cin, Cout)        bf16  parity-grouped, K-concatenated ConvT taps
    # blur_ref : (1, TH, 2, W, 2*Cout)   f32   UNNORMALIZED blur, parity-packed
    # stats_ref: (1, 1, 2, 2*Cout)       f32   per-tile [sum, sumsq] over (TH, 2, W)
    TH = blur_ref.shape[1]
    W = blur_ref.shape[3]
    Cout = blur_ref.shape[4] // 2
    Cin = w_ref.shape[1] // 4
    R = TH + 2  # conv parity rows computed: local q = 0..TH+1  (global p = tS-1+q)

    win = win_ref[0, 0]  # (TH+4, W+2, Cin) bf16

    t = pl.program_id(1)
    first_tile = t == 0
    last_tile = t == pl.num_programs(1) - 1

    # ---- ConvTranspose2d(4,2,1,bias=False): one K=4*Cin MXU matmul per output parity.
    # Output pixel (2p+a, 2q+b) only touches padded-x rows {p+a, p+a+1}, cols {q+b, q+b+1}.
    def conv_parity(a, b):
        parts = [win[a + dy:a + dy + R, b + dx:b + dx + W, :]
                 for dy in (0, 1) for dx in (0, 1)]
        lhs = jnp.concatenate(parts, axis=-1).reshape(R * W, 4 * Cin)  # bf16, K = 4*Cin
        out = jnp.dot(lhs, w_ref[a * 2 + b], preferred_element_type=jnp.float32)
        return out.reshape(R, W, Cout)

    y = {(a, b): conv_parity(a, b) for a in (0, 1) for b in (0, 1)}

    # Boundary masks: reflection only applies at the *image* border (not tile borders).
    o_ids = jax.lax.broadcasted_iota(jnp.int32, (TH, 1, 1), 0)
    top_fix = jnp.logical_and(first_tile, o_ids == 0)
    bot_fix = jnp.logical_and(last_tile, o_ids == TH - 1)
    c_ids = jax.lax.broadcasted_iota(jnp.int32, (1, W, 1), 1)
    left_col = c_ids == 0
    right_col = c_ids == W - 1

    # ---- BlurPool H pass ([1,3,3,1], unnormalized).  Halo conv rows (q=0 and q=TH+1)
    # supply the cross-tile taps; the two image-boundary rows use reflection.
    bh = {}
    for b in (0, 1):
        y0, y1 = y[(0, b)], y[(1, b)]
        y0c, y1c = y0[1:1 + TH], y1[1:1 + TH]              # conv rows at the tile's own p
        y1m = jnp.where(top_fix, y1c, y1[0:TH])            # Y1[p-1]   (reflect -> Y1[0])
        y0p = jnp.where(bot_fix, y0c, y0[2:2 + TH])        # Y0[p+1]   (reflect -> Y0[H-1])
        y1p = jnp.where(bot_fix, y1[0:TH], y1[2:2 + TH])   # Y1[p+1]   (reflect -> Y1[H-2])
        bh[(0, b)] = (y1m + y0p) + 3.0 * (y0c + y1c)
        bh[(1, b)] = (y0c + y1p) + 3.0 * (y1c + y0p)

    # ---- BlurPool W pass: +-1 column neighbours via XLU rolls + edge reflection fix-up.
    # Centered planes are never materialized; only channel sum / sumsq are accumulated.
    ssum = None
    ssq = None
    for a in (0, 1):
        z0, z1 = bh[(a, 0)], bh[(a, 1)]
        z1m = jnp.where(left_col, z1, pltpu.roll(z1, shift=1, axis=1))       # Z1[q-1]
        z0p = jnp.where(right_col, z0, pltpu.roll(z0, shift=W - 1, axis=1))  # Z0[q+1]
        z1p = jnp.where(right_col, z1[:, W - 2:W - 1, :],
                        pltpu.roll(z1, shift=W - 1, axis=1))                 # Z1[q+1]
        bw0 = (z1m + z0p) + 3.0 * (z0 + z1)
        bw1 = (z0 + z1p) + 3.0 * (z1 + z0p)

        # Lane-dense store: fuse the two column-parity planes into one 2*Cout-wide store.
        packed = jnp.concatenate([bw0, bw1], axis=-1)        # (TH, W, 2*Cout) f32
        blur_ref[0, :, a, :, :] = packed
        s = jnp.sum(packed, axis=(0, 1), keepdims=True)      # (1, 1, 2*Cout)
        q = jnp.sum(packed * packed, axis=(0, 1), keepdims=True)
        ssum = s if ssum is None else ssum + s
        ssq = q if ssq is None else ssq + q

    stats_ref[0, 0, 0:1, :] = ssum[0]
    stats_ref[0, 0, 1:2, :] = ssq[0]
    # TODO(synk): optionally emit the blurred intermediate in bf16 (halves the pass-1/2
    # round trip) once downstream tolerance is agreed; stats already accumulate in f32.


def norm_relu_kernel(blur_ref, mean_ref, scale_ref, out_ref):
    # blur_ref: (1, TH, 2, W, 2*Cout) f32 ; mean/scale: (1, 1, 2*Cout) f32 (parity-tiled)
    x = blur_ref[0]
    m = mean_ref[0].reshape(1, 1, 1, -1)
    s = scale_ref[0].reshape(1, 1, 1, -1)
    out_ref[0] = jnp.maximum((x - m) * s, 0.0).astype(out_ref.dtype)


def unet_up_forward(x, skip, w_convt, *, tile_h=16, out_dtype=jnp.float32):
    """UNetUp.forward(x, skip_input) with NCHW inputs and NCHW float32 output."""
    N, Cin, H, W = x.shape
    Cout = w_convt.shape[1]
    assert H >= 2 and W >= 2, "BlurPool reflect padding requires H, W >= 2"
    OH, OW = 2 * H, 2 * W

    # Output-parity rows per tile (TH full-res row pairs); keep H % TH == 0.
    TH = max(1, min(tile_h, H))
    while H % TH:
        TH -= 1
    nT = H // TH

    # ---- layout prep (pure data movement, done once, in bf16) ---------------------------
    x_nhwc = jnp.transpose(x.astype(jnp.bfloat16), (0, 2, 3, 1))        # (N, H, W, Cin)
    # pxe[j] = zero-padded-x row (j-1): 2 zero rows top/bottom, 1 zero col left/right.
    pxe = jnp.pad(x_nhwc, ((0, 0), (2, 2), (1, 1), (0, 0)))             # (N, H+4, W+2, Cin)
    # Overlapping per-tile windows: tile t needs padded rows [t*TH-1, t*TH+TH+2].
    pxw = jnp.stack([pxe[:, t * TH:t * TH + TH + 4] for t in range(nT)], axis=1)

    # Parity-grouped, K-concatenated ConvTranspose taps, channels-last, bf16 for the MXU.
    k_idx = ((3, 1), (2, 0))
    groups = []
    for a in (0, 1):
        for b in (0, 1):
            taps = [w_convt[:, :, k_idx[a][dy], k_idx[b][dx]]
                    for dy in (0, 1) for dx in (0, 1)]                   # each (Cin, Cout)
            groups.append(jnp.concatenate(taps, axis=0))                 # (4*Cin, Cout)
    wcat = jnp.stack(groups, axis=0).astype(jnp.bfloat16)                # (4, 4*Cin, Cout)

    cparams = pltpu.CompilerParams(
        dimension_semantics=("parallel", "parallel"),
        vmem_limit_bytes=_vmem_limit_bytes(),
    )

    # ---- pass 1: ConvT + BlurPool (unnormalized) + per-tile channel partial stats -------
    blur, stats = pl.pallas_call(
        conv_blur_kernel,
        grid=(N, nT),
        in_specs=[
            pl.BlockSpec((1, 1, TH + 4, W + 2, Cin), lambda n, t: (n, t, 0, 0, 0)),
            pl.BlockSpec((4, 4 * Cin, Cout), lambda n, t: (0, 0, 0)),
        ],
        out_specs=[
            pl.BlockSpec((1, TH, 2, W, 2 * Cout), lambda n, t: (n, t, 0, 0, 0)),
            pl.BlockSpec((1, 1, 2, 2 * Cout), lambda n, t: (n, t, 0, 0)),
        ],
        out_shape=[
            jax.ShapeDtypeStruct((N, H, 2, W, 2 * Cout), jnp.float32),
            jax.ShapeDtypeStruct((N, nT, 2, 2 * Cout), jnp.float32),
        ],
        compiler_params=cparams,
    )(pxw, wcat)

    # ---- InstanceNorm statistics from the tiny per-tile partials (XLA) ------------------
    st = jnp.sum(stats, axis=1)                                          # (N, 2, 2*Cout)
    csum = st[:, 0, :Cout] + st[:, 0, Cout:]                             # (N, Cout)
    csq = st[:, 1, :Cout] + st[:, 1, Cout:]
    inv_n = 1.0 / float(OH * OW)
    mean = csum * inv_n
    var = jnp.maximum(csq * inv_n - mean * mean, 0.0)
    # Blur left unnormalized by 64 -> compensate eps by 64**2 (exactly equivalent).
    scale = jax.lax.rsqrt(var + _EPS * _BLUR_NORM * _BLUR_NORM)
    mean2 = jnp.concatenate([mean, mean], axis=-1).reshape(N, 1, 2 * Cout)
    scale2 = jnp.concatenate([scale, scale], axis=-1).reshape(N, 1, 2 * Cout)

    # ---- pass 2: normalize + ReLU (elementwise, parity-packed layout preserved) ---------
    act = pl.pallas_call(
        norm_relu_kernel,
        grid=(N, nT),
        in_specs=[
            pl.BlockSpec((1, TH, 2, W, 2 * Cout), lambda n, t: (n, t, 0, 0, 0)),
            pl.BlockSpec((1, 1, 2 * Cout), lambda n, t: (n, 0, 0)),
            pl.BlockSpec((1, 1, 2 * Cout), lambda n, t: (n, 0, 0)),
        ],
        out_specs=pl.BlockSpec((1, TH, 2, W, 2 * Cout), lambda n, t: (n, t, 0, 0, 0)),
        out_shape=jax.ShapeDtypeStruct((N, H, 2, W, 2 * Cout), out_dtype),
        compiler_params=cparams,
    )(blur, mean2, scale2)

    # (N, H, 2, W, 2*Cout) is row-major identical to (N, 2H, 2W, Cout): free reshape.
    act_nhwc = act.reshape(N, OH, OW, Cout)
    act_nchw = jnp.transpose(act_nhwc, (0, 3, 1, 2)).astype(jnp.float32)
    # Skip is a pure passthrough: concatenate outside the kernels (NHWC consumers could
    # skip the transpose entirely and concat in NHWC).
    # TODO(synk): nn.Dropout is only added when dropout > 0 (module default 0.0); omitted.
    return jnp.concatenate([act_nchw, skip.astype(jnp.float32)], axis=1)


def reference_forward(x, skip, w_convt):
    """Pure-JAX (XLA) reference with identical semantics (incl. the bf16 MXU rounding)."""
    Cout = w_convt.shape[1]
    xr = x.astype(jnp.bfloat16).astype(jnp.float32)
    wr = w_convt.astype(jnp.bfloat16).astype(jnp.float32)
    rhs = jnp.transpose(wr[:, :, ::-1, ::-1], (1, 0, 2, 3))              # (Cout, Cin, 4, 4)
    y = jax.lax.conv_general_dilated(
        xr, rhs, window_strides=(1, 1), padding=((2, 2), (2, 2)),
        lhs_dilation=(2, 2), rhs_dilation=(1, 1),
        dimension_numbers=("NCHW", "OIHW", "NCHW"),
        precision=jax.lax.Precision.HIGHEST)
    a = jnp.array([1.0, 3.0, 3.0, 1.0], jnp.float32)
    filt = (a[:, None] * a[None, :]) / _BLUR_NORM
    yp = jnp.pad(y, ((0, 0), (0, 0), (1, 2), (1, 2)), mode="reflect")
    dw = jnp.broadcast_to(filt, (Cout, 1, 4, 4))
    b = jax.lax.conv_general_dilated(
        yp, dw, window_strides=(1, 1), padding="VALID",
        dimension_numbers=("NCHW", "OIHW", "NCHW"), feature_group_count=Cout,
        precision=jax.lax.Precision.HIGHEST)
    mean = jnp.mean(b, axis=(2, 3), keepdims=True)
    var = jnp.mean((b - mean) ** 2, axis=(2, 3), keepdims=True)
    act = jnp.maximum((b - mean) / jnp.sqrt(var + _EPS), 0.0)
    return jnp.concatenate([act, skip.astype(jnp.float32)], axis=1)


def _check(key, N, Cin, Cout, Cs, H, W, tile_h):
    k1, k2, k3 = jax.random.split(key, 3)
    x = jax.random.normal(k1, (N, Cin, H, W), jnp.float32)
    skip = jax.random.normal(k2, (N, Cs, 2 * H, 2 * W), jnp.float32)
    # ConvTranspose2d weight shape: (in_channels, out_channels, kH, kW), bias=False
    w = jax.random.normal(k3, (Cin, Cout, 4, 4), jnp.float32) / math.sqrt(Cin * 16)

    out = jax.block_until_ready(unet_up_forward(x, skip, w, tile_h=tile_h))
    assert out.shape == (N, Cout + Cs, 2 * H, 2 * W), out.shape

    ref = jax.block_until_ready(reference_forward(x, skip, w))
    err = float(jnp.max(jnp.abs(out - ref)))
    assert jnp.allclose(out, ref, atol=5e-3, rtol=5e-3), err
    return err


if __name__ == "__main__":
    key = jax.random.PRNGKey(0)
    ka, kb = jax.random.split(key)
    # single-tile path (nT = 1)
    _check(ka, N=2, Cin=8, Cout=4, Cs=4, H=8, W=8, tile_h=16)
    # multi-tile path (nT = 3: top/interior/bottom halos) + non-multiple-of-8 spatial dims
    _check(kb, N=1, Cin=16, Cout=8, Cs=2, H=12, W=12, tile_h=4)
    print("KERNEL_OK")
</pallas_src>

<mosaic_0001>
module attributes {stable_mosaic.version = 11 : i64} {
  func.func @conv_blur_kernel(%arg0: i32, %arg1: i32, %arg2: memref<1x1x12x10x8xbf16, #tpu.memory_space<vmem>>, %arg3: memref<4x32x4xbf16, #tpu.memory_space<vmem>>, %arg4: memref<1x8x2x8x8xf32, #tpu.memory_space<vmem>>, %arg5: memref<1x1x2x8xf32, #tpu.memory_space<vmem>>) attributes {dimension_semantics = [#tpu.dimension_semantics<parallel>, #tpu.dimension_semantics<parallel>], iteration_bounds = array<i64: 2, 1>, scalar_prefetch = 0 : i64, scratch_operands = 0 : i64, tpu.core_type = #tpu.core_type<tc>, window_params = [{transform_indices = @transform_0, window_bounds = array<i64: 1, 1, 12, 10, 8>}, {pipeline_mode = #tpu.pipeline_mode<synchronous>, transform_indices = @transform_1, window_bounds = array<i64: 4, 32, 4>}, {transform_indices = @transform_2, window_bounds = array<i64: 1, 8, 2, 8, 8>}, {transform_indices = @transform_3, window_bounds = array<i64: 1, 1, 2, 8>}]} {
    %c0 = arith.constant 0 : index
    %c0_0 = arith.constant 0 : index
    %c0_1 = arith.constant 0 : index
    %c0_2 = arith.constant 0 : index
    %c0_3 = arith.constant 0 : index
    %0 = vector.load %arg2[%c0, %c0_0, %c0_1, %c0_2, %c0_3] : memref<1x1x12x10x8xbf16, #tpu.memory_space<vmem>>, vector<1x1x12x10x8xbf16>
    %1 = vector.shape_cast %0 : vector<1x1x12x10x8xbf16> to vector<12x10x8xbf16>
    %c0_i32 = arith.constant 0 : i32
    %2 = arith.cmpi eq, %arg1, %c0_i32 : i32
    %c0_i32_4 = arith.constant 0 : i32
    %3 = arith.cmpi eq, %arg1, %c0_i32_4 : i32
    %4 = vector.extract_strided_slice %1 {offsets = [0, 0, 0], sizes = [10, 8, 8], strides = [1, 1, 1]} : vector<12x10x8xbf16> to vector<10x8x8xbf16>
    %5 = vector.extract_strided_slice %1 {offsets = [0, 1, 0], sizes = [10, 8, 8], strides = [1, 1, 1]} : vector<12x10x8xbf16> to vector<10x8x8xbf16>
    %6 = vector.extract_strided_slice %1 {offsets = [1, 0, 0], sizes = [10, 8, 8], strides = [1, 1, 1]} : vector<12x10x8xbf16> to vector<10x8x8xbf16>
    %7 = vector.extract_strided_slice %1 {offsets = [1, 1, 0], sizes = [10, 8, 8], strides = [1, 1, 1]} : vector<12x10x8xbf16> to vector<10x8x8xbf16>
    %8 = tpu.concatenate %4, %5, %6, %7 in 2 : vector<10x8x8xbf16>, vector<10x8x8xbf16>, vector<10x8x8xbf16>, vector<10x8x8xbf16> -> vector<10x8x32xbf16>
    %9 = vector.shape_cast %8 : vector<10x8x32xbf16> to vector<80x32xbf16>
    %c0_5 = arith.constant 0 : index
    %c0_6 = arith.constant 0 : index
    %c0_7 = arith.constant 0 : index
    %10 = vector.load %arg3[%c0_5, %c0_6, %c0_7] : memref<4x32x4xbf16, #tpu.memory_space<vmem>>, vector<1x32x4xbf16>
    %11 = vector.shape_cast %10 : vector<1x32x4xbf16> to vector<32x4xbf16>
    %cst = arith.constant dense<0.000000e+00> : vector<80x4xf32>
    %12 = tpu.matmul %9, %11, %cst {dimension_numbers = #tpu.dot_dimension_numbers<[1], [0], [0], [1], [0, 0, 1, 1], [], []>} : vector<80x32xbf16>, vector<32x4xbf16>, vector<80x4xf32> -> vector<80x4xf32>
    %13 = vector.shape_cast %12 : vector<80x4xf32> to vector<10x8x4xf32>
    %14 = vector.extract_strided_slice %1 {offsets = [0, 1, 0], sizes = [10, 8, 8], strides = [1, 1, 1]} : vector<12x10x8xbf16> to vector<10x8x8xbf16>
    %15 = vector.extract_strided_slice %1 {offsets = [0, 2, 0], sizes = [10, 8, 8], strides = [1, 1, 1]} : vector<12x10x8xbf16> to vector<10x8x8xbf16>
    %16 = vector.extract_strided_slice %1 {offsets = [1, 1, 0], sizes = [10, 8, 8], strides = [1, 1, 1]} : vector<12x10x8xbf16> to vector<10x8x8xbf16>
    %17 = vector.extract_strided_slice %1 {offsets = [1, 2, 0], sizes = [10, 8, 8], strides = [1, 1, 1]} : vector<12x10x8xbf16> to vector<10x8x8xbf16>
    %18 = tpu.concatenate %14, %15, %16, %17 in 2 : vector<10x8x8xbf16>, vector<10x8x8xbf16>, vector<10x8x8xbf16>, vector<10x8x8xbf16> -> vector<10x8x32xbf16>
    %19 = vector.shape_cast %18 : vector<10x8x32xbf16> to vector<80x32xbf16>
    %c1 = arith.constant 1 : index
    %c0_8 = arith.constant 0 : index
    %c0_9 = arith.constant 0 : index
    %20 = vector.load %arg3[%c1, %c0_8, %c0_9] : memref<4x32x4xbf16, #tpu.memory_space<vmem>>, vector<1x32x4xbf16>
    %21 = vector.shape_cast %20 : vector<1x32x4xbf16> to vector<32x4xbf16>
    %cst_10 = arith.constant dense<0.000000e+00> : vector<80x4xf32>
    %22 = tpu.matmul %19, %21, %cst_10 {dimension_numbers = #tpu.dot_dimension_numbers<[1], [0], [0], [1], [0, 0, 1, 1], [], []>} : vector<80x32xbf16>, vector<32x4xbf16>, vector<80x4xf32> -> vector<80x4xf32>
    %23 = vector.shape_cast %22 : vector<80x4xf32> to vector<10x8x4xf32>
    %24 = vector.extract_strided_slice %1 {offsets = [1, 0, 0], sizes = [10, 8, 8], strides = [1, 1, 1]} : vector<12x10x8xbf16> to vector<10x8x8xbf16>
    %25 = vector.extract_strided_slice %1 {offsets = [1, 1, 0], sizes = [10, 8, 8], strides = [1, 1, 1]} : vector<12x10x8xbf16> to vector<10x8x8xbf16>
    %26 = vector.extract_strided_slice %1 {offsets = [2, 0, 0], sizes = [10, 8, 8], strides = [1, 1, 1]} : vector<12x10x8xbf16> to vector<10x8x8xbf16>
    %27 = vector.extract_strided_slice %1 {offsets = [2, 1, 0], sizes = [10, 8, 8], strides = [1, 1, 1]} : vector<12x10x8xbf16> to vector<10x8x8xbf16>
    %28 = tpu.concatenate %24, %25, %26, %27 in 2 : vector<10x8x8xbf16>, vector<10x8x8xbf16>, vector<10x8x8xbf16>, vector<10x8x8xbf16> -> vector<10x8x32xbf16>
    %29 = vector.shape_cast %28 : vector<10x8x32xbf16> to vector<80x32xbf16>
    %c2 = arith.constant 2 : index
    %c0_11 = arith.constant 0 : index
    %c0_12 = arith.constant 0 : index
    %30 = vector.load %arg3[%c2, %c0_11, %c0_12] : memref<4x32x4xbf16, #tpu.memory_space<vmem>>, vector<1x32x4xbf16>
    %31 = vector.shape_cast %30 : vector<1x32x4xbf16> to vector<32x4xbf16>
    %cst_13 = arith.constant dense<0.000000e+00> : vector<80x4xf32>
    %32 = tpu.matmul %29, %31, %cst_13 {dimension_numbers = #tpu.dot_dimension_numbers<[1], [0], [0], [1], [0, 0, 1, 1], [], []>} : vector<80x32xbf16>, vector<32x4xbf16>, vector<80x4xf32> -> vector<80x4xf32>
    %33 = vector.shape_cast %32 : vector<80x4xf32> to vector<10x8x4xf32>
    %34 = vector.extract_strided_slice %1 {offsets = [1, 1, 0], sizes = [10, 8, 8], strides = [1, 1, 1]} : vector<12x10x8xbf16> to vector<10x8x8xbf16>
    %35 = vector.extract_strided_slice %1 {offsets = [1, 2, 0], sizes = [10, 8, 8], strides = [1, 1, 1]} : vector<12x10x8xbf16> to vector<10x8x8xbf16>
    %36 = vector.extract_strided_slice %1 {offsets = [2, 1, 0], sizes = [10, 8, 8], strides = [1, 1, 1]} : vector<12x10x8xbf16> to vector<10x8x8xbf16>
    %37 = vector.extract_strided_slice %1 {offsets = [2, 2, 0], sizes = [10, 8, 8], strides = [1, 1, 1]} : vector<12x10x8xbf16> to vector<10x8x8xbf16>
    %38 = tpu.concatenate %34, %35, %36, %37 in 2 : vector<10x8x8xbf16>, vector<10x8x8xbf16>, vector<10x8x8xbf16>, vector<10x8x8xbf16> -> vector<10x8x32xbf16>
    %39 = vector.shape_cast %38 : vector<10x8x32xbf16> to vector<80x32xbf16>
    %c3 = arith.constant 3 : index
    %c0_14 = arith.constant 0 : index
    %c0_15 = arith.constant 0 : index
    %40 = vector.load %arg3[%c3, %c0_14, %c0_15] : memref<4x32x4xbf16, #tpu.memory_space<vmem>>, vector<1x32x4xbf16>
    %41 = vector.shape_cast %40 : vector<1x32x4xbf16> to vector<32x4xbf16>
    %cst_16 = arith.constant dense<0.000000e+00> : vector<80x4xf32>
    %42 = tpu.matmul %39, %41, %cst_16 {dimension_numbers = #tpu.dot_dimension_numbers<[1], [0], [0], [1], [0, 0, 1, 1], [], []>} : vector<80x32xbf16>, vector<32x4xbf16>, vector<80x4xf32> -> vector<80x4xf32>
    %43 = vector.shape_cast %42 : vector<80x4xf32> to vector<10x8x4xf32>
    %44 = tpu.iota {dimensions = array<i32: 0>} : vector<8x1x1xi32>
    %c0_i32_17 = arith.constant 0 : i32
    %45 = vector.broadcast %c0_i32_17 : i32 to vector<8x1x1xi32>
    %46 = arith.cmpi eq, %44, %45 : vector<8x1x1xi32>
    %47 = vector.broadcast %2 : i1 to vector<8x1x1xi1>
    %48 = arith.andi %47, %46 : vector<8x1x1xi1>
    %c7_i32 = arith.constant 7 : i32
    %49 = vector.broadcast %c7_i32 : i32 to vector<8x1x1xi32>
    %50 = arith.cmpi eq, %44, %49 : vector<8x1x1xi32>
    %51 = vector.broadcast %3 : i1 to vector<8x1x1xi1>
    %52 = arith.andi %51, %50 : vector<8x1x1xi1>
    %53 = tpu.iota {dimensions = array<i32: 1>} : vector<1x8x1xi32>
    %c0_i32_18 = arith.constant 0 : i32
    %54 = vector.broadcast %c0_i32_18 : i32 to vector<1x8x1xi32>
    %55 = arith.cmpi eq, %53, %54 : vector<1x8x1xi32>
    %c7_i32_19 = arith.constant 7 : i32
    %56 = vector.broadcast %c7_i32_19 : i32 to vector<1x8x1xi32>
    %57 = arith.cmpi eq, %53, %56 : vector<1x8x1xi32>
    %58 = vector.extract_strided_slice %13 {offsets = [1, 0, 0], sizes = [8, 8, 4], strides = [1, 1, 1]} : vector<10x8x4xf32> to vector<8x8x4xf32>
    %59 = vector.extract_strided_slice %33 {offsets = [1, 0, 0], sizes = [8, 8, 4], strides = [1, 1, 1]} : vector<10x8x4xf32> to vector<8x8x4xf32>
    %60 = vector.extract_strided_slice %33 {offsets = [0, 0, 0], sizes = [8, 8, 4], strides = [1, 1, 1]} : vector<10x8x4xf32> to vector<8x8x4xf32>
    %61 = vector.shape_cast %48 : vector<8x1x1xi1> to vector<8x1x1xi1>
    %62 = vector.broadcast %61 : vector<8x1x1xi1> to vector<8x8x4xi1>
    %63 = arith.select %62, %59, %60 : vector<8x8x4xi1>, vector<8x8x4xf32>
    %64 = vector.extract_strided_slice %13 {offsets = [2, 0, 0], sizes = [8, 8, 4], strides = [1, 1, 1]} : vector<10x8x4xf32> to vector<8x8x4xf32>
    %65 = vector.shape_cast %52 : vector<8x1x1xi1> to vector<8x1x1xi1>
    %66 = vector.broadcast %65 : vector<8x1x1xi1> to vector<8x8x4xi1>
    %67 = arith.select %66, %58, %64 : vector<8x8x4xi1>, vector<8x8x4xf32>
    %68 = vector.extract_strided_slice %33 {offsets = [0, 0, 0], sizes = [8, 8, 4], strides = [1, 1, 1]} : vector<10x8x4xf32> to vector<8x8x4xf32>
    %69 = vector.extract_strided_slice %33 {offsets = [2, 0, 0], sizes = [8, 8, 4], strides = [1, 1, 1]} : vector<10x8x4xf32> to vector<8x8x4xf32>
    %70 = vector.shape_cast %52 : vector<8x1x1xi1> to vector<8x1x1xi1>
    %71 = vector.broadcast %70 : vector<8x1x1xi1> to vector<8x8x4xi1>
    %72 = arith.select %71, %68, %69 : vector<8x8x4xi1>, vector<8x8x4xf32>
    %73 = arith.addf %63, %67 : vector<8x8x4xf32>
    %74 = arith.addf %58, %59 : vector<8x8x4xf32>
    %cst_20 = arith.constant 3.000000e+00 : f32
    %75 = vector.broadcast %cst_20 : f32 to vector<8x8x4xf32>
    %76 = arith.mulf %75, %74 : vector<8x8x4xf32>
    %77 = arith.addf %73, %76 : vector<8x8x4xf32>
    %78 = arith.addf %58, %72 : vector<8x8x4xf32>
    %79 = arith.addf %59, %67 : vector<8x8x4xf32>
    %cst_21 = arith.constant 3.000000e+00 : f32
    %80 = vector.broadcast %cst_21 : f32 to vector<8x8x4xf32>
    %81 = arith.mulf %80, %79 : vector<8x8x4xf32>
    %82 = arith.addf %78, %81 : vector<8x8x4xf32>
    %83 = vector.extract_strided_slice %23 {offsets = [1, 0, 0], sizes = [8, 8, 4], strides = [1, 1, 1]} : vector<10x8x4xf32> to vector<8x8x4xf32>
    %84 = vector.extract_strided_slice %43 {offsets = [1, 0, 0], sizes = [8, 8, 4], strides = [1, 1, 1]} : vector<10x8x4xf32> to vector<8x8x4xf32>
    %85 = vector.extract_strided_slice %43 {offsets = [0, 0, 0], sizes = [8, 8, 4], strides = [1, 1, 1]} : vector<10x8x4xf32> to vector<8x8x4xf32>
    %86 = vector.shape_cast %48 : vector<8x1x1xi1> to vector<8x1x1xi1>
    %87 = vector.broadcast %86 : vector<8x1x1xi1> to vector<8x8x4xi1>
    %88 = arith.select %87, %84, %85 : vector<8x8x4xi1>, vector<8x8x4xf32>
    %89 = vector.extract_strided_slice %23 {offsets = [2, 0, 0], sizes = [8, 8, 4], strides = [1, 1, 1]} : vector<10x8x4xf32> to vector<8x8x4xf32>
    %90 = vector.shape_cast %52 : vector<8x1x1xi1> to vector<8x1x1xi1>
    %91 = vector.broadcast %90 : vector<8x1x1xi1> to vector<8x8x4xi1>
    %92 = arith.select %91, %83, %89 : vector<8x8x4xi1>, vector<8x8x4xf32>
    %93 = vector.extract_strided_slice %43 {offsets = [0, 0, 0], sizes = [8, 8, 4], strides = [1, 1, 1]} : vector<10x8x4xf32> to vector<8x8x4xf32>
    %94 = vector.extract_strided_slice %43 {offsets = [2, 0, 0], sizes = [8, 8, 4], strides = [1, 1, 1]} : vector<10x8x4xf32> to vector<8x8x4xf32>
    %95 = vector.shape_cast %52 : vector<8x1x1xi1> to vector<8x1x1xi1>
    %96 = vector.broadcast %95 : vector<8x1x1xi1> to vector<8x8x4xi1>
    %97 = arith.select %96, %93, %94 : vector<8x8x4xi1>, vector<8x8x4xf32>
    %98 = arith.addf %88, %92 : vector<8x8x4xf32>
    %99 = arith.addf %83, %84 : vector<8x8x4xf32>
    %cst_22 = arith.constant 3.000000e+00 : f32
    %100 = vector.broadcast %cst_22 : f32 to vector<8x8x4xf32>
    %101 = arith.mulf %100, %99 : vector<8x8x4xf32>
    %102 = arith.addf %98, %101 : vector<8x8x4xf32>
    %103 = arith.addf %83, %97 : vector<8x8x4xf32>
    %104 = arith.addf %84, %92 : vector<8x8x4xf32>
    %cst_23 = arith.constant 3.000000e+00 : f32
    %105 = vector.broadcast %cst_23 : f32 to vector<8x8x4xf32>
    %106 = arith.mulf %105, %104 : vector<8x8x4xf32>
    %107 = arith.addf %103, %106 : vector<8x8x4xf32>
    %c1_i32 = arith.constant 1 : i32
    %108 = tpu.dynamic_rotate %102 by %c1_i32 dim 1 : vector<8x8x4xf32>, i32 -> vector<8x8x4xf32>
    %109 = vector.shape_cast %55 : vector<1x8x1xi1> to vector<1x8x1xi1>
    %110 = vector.broadcast %109 : vector<1x8x1xi1> to vector<8x8x4xi1>
    %111 = arith.select %110, %102, %108 : vector<8x8x4xi1>, vector<8x8x4xf32>
    %c7_i32_24 = arith.constant 7 : i32
    %112 = tpu.dynamic_rotate %77 by %c7_i32_24 dim 1 : vector<8x8x4xf32>, i32 -> vector<8x8x4xf32>
    %113 = vector.shape_cast %57 : vector<1x8x1xi1> to vector<1x8x1xi1>
    %114 = vector.broadcast %113 : vector<1x8x1xi1> to vector<8x8x4xi1>
    %115 = arith.select %114, %77, %112 : vector<8x8x4xi1>, vector<8x8x4xf32>
    %116 = vector.extract_strided_slice %102 {offsets = [0, 6, 0], sizes = [8, 1, 4], strides = [1, 1, 1]} : vector<8x8x4xf32> to vector<8x1x4xf32>
    %c7_i32_25 = arith.constant 7 : i32
    %117 = tpu.dynamic_rotate %102 by %c7_i32_25 dim 1 : vector<8x8x4xf32>, i32 -> vector<8x8x4xf32>
    %118 = vector.shape_cast %57 : vector<1x8x1xi1> to vector<1x8x1xi1>
    %119 = vector.broadcast %118 : vector<1x8x1xi1> to vector<8x8x4xi1>
    %120 = vector.shape_cast %116 : vector<8x1x4xf32> to vector<8x1x4xf32>
    %121 = vector.broadcast %120 : vector<8x1x4xf32> to vector<8x8x4xf32>
    %122 = arith.select %119, %121, %117 : vector<8x8x4xi1>, vector<8x8x4xf32>
    %123 = arith.addf %111, %115 : vector<8x8x4xf32>
    %124 = arith.addf %77, %102 : vector<8x8x4xf32>
    %cst_26 = arith.constant 3.000000e+00 : f32
    %125 = vector.broadcast %cst_26 : f32 to vector<8x8x4xf32>
    %126 = arith.mulf %125, %124 : vector<8x8x4xf32>
    %127 = arith.addf %123, %126 : vector<8x8x4xf32>
    %128 = arith.addf %77, %122 : vector<8x8x4xf32>
    %129 = arith.addf %102, %115 : vector<8x8x4xf32>
    %cst_27 = arith.constant 3.000000e+00 : f32
    %130 = vector.broadcast %cst_27 : f32 to vector<8x8x4xf32>
    %131 = arith.mulf %130, %129 : vector<8x8x4xf32>
    %132 = arith.addf %128, %131 : vector<8x8x4xf32>
    %133 = tpu.concatenate %127, %132 in 2 : vector<8x8x4xf32>, vector<8x8x4xf32> -> vector<8x8x8xf32>
    %c0_28 = arith.constant 0 : index
    %c0_29 = arith.constant 0 : index
    %c0_30 = arith.constant 0 : index
    %c0_31 = arith.constant 0 : index
    %c0_32 = arith.constant 0 : index
    %134 = vector.load %arg4[%c0_28, %c0_29, %c0_30, %c0_31, %c0_32] : memref<1x8x2x8x8xf32, #tpu.memory_space<vmem>>, vector<1x8x1x8x8xf32>
    %135 = vector.shape_cast %134 : vector<1x8x1x8x8xf32> to vector<8x8x8xf32>
    %136 = vector.shape_cast %133 : vector<8x8x8xf32> to vector<1x8x1x8x8xf32>
    tpu.vector_store %arg4[%c0_28, %c0_29, %c0_30, %c0_31, %c0_32], %136 {strides = array<i32>} : memref<1x8x2x8x8xf32, #tpu.memory_space<vmem>>, vector<1x8x1x8x8xf32>,
    %cst_33 = arith.constant dense<0.000000e+00> : vector<8xf32>
    %137 = vector.multi_reduction <add>, %133, %cst_33 [0, 1] : vector<8x8x8xf32> to vector<8xf32>
    %138 = vector.shape_cast %137 : vector<8xf32> to vector<1x1x8xf32>
    %139 = arith.mulf %133, %133 : vector<8x8x8xf32>
    %cst_34 = arith.constant dense<0.000000e+00> : vector<8xf32>
    %140 = vector.multi_reduction <add>, %139, %cst_34 [0, 1] : vector<8x8x8xf32> to vector<8xf32>
    %141 = vector.shape_cast %140 : vector<8xf32> to vector<1x1x8xf32>
    %c1_i32_35 = arith.constant 1 : i32
    %142 = tpu.dynamic_rotate %107 by %c1_i32_35 dim 1 : vector<8x8x4xf32>, i32 -> vector<8x8x4xf32>
    %143 = vector.shape_cast %55 : vector<1x8x1xi1> to vector<1x8x1xi1>
    %144 = vector.broadcast %143 : vector<1x8x1xi1> to vector<8x8x4xi1>
    %145 = arith.select %144, %107, %142 : vector<8x8x4xi1>, vector<8x8x4xf32>
    %c7_i32_36 = arith.constant 7 : i32
    %146 = tpu.dynamic_rotate %82 by %c7_i32_36 dim 1 : vector<8x8x4xf32>, i32 -> vector<8x8x4xf32>
    %147 = vector.shape_cast %57 : vector<1x8x1xi1> to vector<1x8x1xi1>
    %148 = vector.broadcast %147 : vector<1x8x1xi1> to vector<8x8x4xi1>
    %149 = arith.select %148, %82, %146 : vector<8x8x4xi1>, vector<8x8x4xf32>
    %150 = vector.extract_strided_slice %107 {offsets = [0, 6, 0], sizes = [8, 1, 4], strides = [1, 1, 1]} : vector<8x8x4xf32> to vector<8x1x4xf32>
    %c7_i32_37 = arith.constant 7 : i32
    %151 = tpu.dynamic_rotate %107 by %c7_i32_37 dim 1 : vector<8x8x4xf32>, i32 -> vector<8x8x4xf32>
    %152 = vector.shape_cast %57 : vector<1x8x1xi1> to vector<1x8x1xi1>
    %153 = vector.broadcast %152 : vector<1x8x1xi1> to vector<8x8x4xi1>
    %154 = vector.shape_cast %150 : vector<8x1x4xf32> to vector<8x1x4xf32>
    %155 = vector.broadcast %154 : vector<8x1x4xf32> to vector<8x8x4xf32>
    %156 = arith.select %153, %155, %151 : vector<8x8x4xi1>, vector<8x8x4xf32>
    %157 = arith.addf %145, %149 : vector<8x8x4xf32>
    %158 = arith.addf %82, %107 : vector<8x8x4xf32>
    %cst_38 = arith.constant 3.000000e+00 : f32
    %159 = vector.broadcast %cst_38 : f32 to vector<8x8x4xf32>
    %160 = arith.mulf %159, %158 : vector<8x8x4xf32>
    %161 = arith.addf %157, %160 : vector<8x8x4xf32>
    %162 = arith.addf %82, %156 : vector<8x8x4xf32>
    %163 = arith.addf %107, %149 : vector<8x8x4xf32>
    %cst_39 = arith.constant 3.000000e+00 : f32
    %164 = vector.broadcast %cst_39 : f32 to vector<8x8x4xf32>
    %165 = arith.mulf %164, %163 : vector<8x8x4xf32>
    %166 = arith.addf %162, %165 : vector<8x8x4xf32>
    %167 = tpu.concatenate %161, %166 in 2 : vector<8x8x4xf32>, vector<8x8x4xf32> -> vector<8x8x8xf32>
    %c0_40 = arith.constant 0 : index
    %c0_41 = arith.constant 0 : index
    %c1_42 = arith.constant 1 : index
    %c0_43 = arith.constant 0 : index
    %c0_44 = arith.constant 0 : index
    %168 = vector.load %arg4[%c0_40, %c0_41, %c1_42, %c0_43, %c0_44] : memref<1x8x2x8x8xf32, #tpu.memory_space<vmem>>, vector<1x8x1x8x8xf32>
    %169 = vector.shape_cast %168 : vector<1x8x1x8x8xf32> to vector<8x8x8xf32>
    %170 = vector.shape_cast %167 : vector<8x8x8xf32> to vector<1x8x1x8x8xf32>
    tpu.vector_store %arg4[%c0_40, %c0_41, %c1_42, %c0_43, %c0_44], %170 {strides = array<i32>} : memref<1x8x2x8x8xf32, #tpu.memory_space<vmem>>, vector<1x8x1x8x8xf32>,
    %cst_45 = arith.constant dense<0.000000e+00> : vector<8xf32>
    %171 = vector.multi_reduction <add>, %167, %cst_45 [0, 1] : vector<8x8x8xf32> to vector<8xf32>
    %172 = vector.shape_cast %171 : vector<8xf32> to vector<1x1x8xf32>
    %173 = arith.mulf %167, %167 : vector<8x8x8xf32>
    %cst_46 = arith.constant dense<0.000000e+00> : vector<8xf32>
    %174 = vector.multi_reduction <add>, %173, %cst_46 [0, 1] : vector<8x8x8xf32> to vector<8xf32>
    %175 = vector.shape_cast %174 : vector<8xf32> to vector<1x1x8xf32>
    %176 = arith.addf %138, %172 : vector<1x1x8xf32>
    %177 = arith.addf %141, %175 : vector<1x1x8xf32>
    %178 = vector.shape_cast %176 : vector<1x1x8xf32> to vector<1x8xf32>
    %c0_47 = arith.constant 0 : index
    %c0_48 = arith.constant 0 : index
    %c0_49 = arith.constant 0 : index
    %c0_50 = arith.constant 0 : index
    %179 = vector.load %arg5[%c0_47, %c0_48, %c0_49, %c0_50] : memref<1x1x2x8xf32, #tpu.memory_space<vmem>>, vector<1x1x1x8xf32>
    %180 = vector.shape_cast %179 : vector<1x1x1x8xf32> to vector<1x8xf32>
    %181 = vector.shape_cast %178 : vector<1x8xf32> to vector<1x1x1x8xf32>
    tpu.vector_store %arg5[%c0_47, %c0_48, %c0_49, %c0_50], %181 {strides = array<i32>} : memref<1x1x2x8xf32, #tpu.memory_space<vmem>>, vector<1x1x1x8xf32>,
    %182 = vector.shape_cast %177 : vector<1x1x8xf32> to vector<1x8xf32>
    %c0_51 = arith.constant 0 : index
    %c0_52 = arith.constant 0 : index
    %c1_53 = arith.constant 1 : index
    %c0_54 = arith.constant 0 : index
    %183 = vector.load %arg5[%c0_51, %c0_52, %c1_53, %c0_54] : memref<1x1x2x8xf32, #tpu.memory_space<vmem>>, vector<1x1x1x8xf32>
    %184 = vector.shape_cast %183 : vector<1x1x1x8xf32> to vector<1x8xf32>
    %185 = vector.shape_cast %182 : vector<1x8xf32> to vector<1x1x1x8xf32>
    tpu.vector_store %arg5[%c0_51, %c0_52, %c1_53, %c0_54], %185 {strides = array<i32>} : memref<1x1x2x8xf32, #tpu.memory_space<vmem>>, vector<1x1x1x8xf32>,
    return
  }
  func.func @transform_0(%arg0: i32, %arg1: i32) -> (i32, i32, i32, i32, i32) {
    %c0_i32 = arith.constant 0 : i32
    %c0_i32_0 = arith.constant 0 : i32
    %c0_i32_1 = arith.constant 0 : i32
    %c0_i32_2 = arith.constant 0 : i32
    return %arg0, %arg1, %c0_i32, %c0_i32_0, %c0_i32_1 : i32, i32, i32, i32, i32
  }
  func.func @transform_1(%arg0: i32, %arg1: i32) -> (i32, i32, i32) {
    %c0_i32 = arith.constant 0 : i32
    %c0_i32_0 = arith.constant 0 : i32
    %c0_i32_1 = arith.constant 0 : i32
    %c0_i32_2 = arith.constant 0 : i32
    return %c0_i32, %c0_i32_0, %c0_i32_1 : i32, i32, i32
  }
  func.func @transform_2(%arg0: i32, %arg1: i32) -> (i32, i32, i32, i32, i32) {
    %c0_i32 = arith.constant 0 : i32
    %c0_i32_0 = arith.constant 0 : i32
    %c0_i32_1 = arith.constant 0 : i32
    %c0_i32_2 = arith.constant 0 : i32
    return %arg0, %arg1, %c0_i32, %c0_i32_0, %c0_i32_1 : i32, i32, i32, i32, i32
  }
  func.func @transform_3(%arg0: i32, %arg1: i32) -> (i32, i32, i32, i32) {
    %c0_i32 = arith.constant 0 : i32
    %c0_i32_0 = arith.constant 0 : i32
    %c0_i32_1 = arith.constant 0 : i32
    return %arg0, %arg1, %c0_i32, %c0_i32_0 : i32, i32, i32, i32
  }
}

</mosaic_0001>

<llo_original>
// kernel: tpu_custom_call.1
$region0: #{tpu_custom_call.1}
  #allocation0 [shape = 'u32[]', space=smem, size = 0x4, offset = 0x4, fixed_abs, tag = 'smem constant byte address 0x4 - core index']
  #allocation1 [shape = 'u32[144,128]{1,0:T(1,128)}', space=vmem, size = 0x12000, scoped, tag = 'internal scratch']
  %s0 = inlined_call_operand.vmem [shape: bf16[2,1,12,10,8], index: 0, kind: input, shape index: {}]
  %s1 = inlined_call_operand.vmem [shape: bf16[4,32,4], index: 1, kind: input, shape index: {}]
  %s2 = inlined_call_operand.hbm [shape: f32[2,8,2,8,8], index: 2, kind: output, shape index: {0}]
  %s3 = inlined_call_operand.hbm [shape: f32[2,1,2,8], index: 3, kind: output, shape index: {1}]
  %4 = xla_tuple %s2, %s3
  %s5 = sld [smem:[#allocation0]]
  $region49: #{tpu_custom_call.1} parent=0
    _
  %s7 = ssub.s32 1, %s5
  %s8 = scalar_select 0, %s7, %s5
  $region1: #{tpu_custom_call.1} parent=0
    #allocation2 [shape = 'u8[131072]{0}', space=vmem, size = 0x20000, scoped, tag = 'output window, operand 0']
    #allocation3 [shape = 's32[2]{0}', space=sflag, size = 0x8, scoped, tag = 'scoped memory for tpu_custom_call.1']
    #allocation4 [shape = 'u8[2048]{0}', space=vmem, size = 0x800, scoped, tag = 'output window, operand 1']
    #allocation5 [shape = 's32[2]{0}', space=sflag, size = 0x8, scoped, tag = 'scoped memory for tpu_custom_call.1']
    %9 = vsyncpa [#allocation3], 0
    %s10 = scalar_lea.sflag [#allocation3], 1
    %11 = vsyncpa %s10, 0
    %12 = vsyncpa [#allocation5], 0
    %s13 = scalar_lea.sflag [#allocation5], 1
    %14 = vsyncpa %s13, 0
    loop: start=0, step=1, limit=4
    $region2: #{tpu_custom_call.1} parent=1 // loop_pre_header
      _
    $region3: #{tpu_custom_call.1} parent=1 // loop_header
      %s16 = sphi 0, %s20
      %p17 = scmp.ge.s32.totalorder %s16, 4
      %s23 = sphi 0, %s35
      %s24 = sphi 0, %s31
      %s25 = sphi 0, %s23
      %s26 = sphi 0, %s24
      %s27 = sphi 0, %s25
      %s28 = sphi 0, %s26
      %s40 = sphi 0, %s42
      %s43 = sphi 0, %s40
      %s44 = sphi 0, %s43
      %s60 = sphi 0, %s44
      %s64 = sphi 0, %s64
      %s66 = sphi 0, %s64
      %s67 = sphi 0, %s66
      %s81 = sphi 0, %s67
      %s89 = sphi 0, %s91
      %s92 = sphi 0, %s89
      %s93 = sphi 0, %s92
      %s109 = sphi 0, %s93
      %s117 = sphi 0, %s119
      %s120 = sphi 0, %s117
      %s121 = sphi 0, %s120
      %s137 = sphi 0, %s121
    $region4: #{tpu_custom_call.1} parent=1 // loop_header_branch
      %19 = sbr.rel (%p17) target = $region8
    $region5: #{tpu_custom_call.1} parent=1 // loop_body
      %s21 = ssub.s32 %s16, 1
      %s22 = ssub.s32 %s16, 2
      %s29 = sadd.s32 1, %s24
      %p30 = scmp.ge.s32.totalorder %s29, 1
      %s31 = scalar_select %p30, 0, %s29
      %s32 = sadd.s32 1, %s23
      %s33 = scalar_select %p30, %s32, %s23
      %p34 = scmp.ge.s32.totalorder %s33, 2
      %s35 = scalar_select %p34, 0, %s33
      %s36 = ssub.s32 %s23, %s35
      %s37 = ssub.s32 %s24, %s31
      %s38 = sor.u32 %s36, %s37
      %p39 = scmp.eq.s32.totalorder %s38, 0
      %s41 = sadd.s32 %s40, 1
      %s42 = scalar_select %p39, %s40, %s41
      %p45 = pneg %p39
      %p46 = scmp.eq.s32.totalorder %s16, 1
      %p47 = por %p45, %p46
      %p48 = scmp.ne.s32.totalorder %s40, %s43
      %p49 = scmp.eq.s32.totalorder %s16, 0
      %p50 = por %p48, %p49
      %p51 = scmp.ne.s32.totalorder %s40, %s43
      %p52 = scmp.eq.s32.totalorder %s21, 1
      %p53 = por %p51, %p52
      %p54 = scmp.ne.s32.totalorder %s43, %s44
      %p55 = scmp.eq.s32.totalorder %s21, 0
      %p56 = por %p54, %p55
      %p57 = scmp.ne.s32.totalorder %s43, %s44
      %p58 = scmp.eq.s32.totalorder %s22, 1
      %p59 = por %p57, %p58
      %p61 = scmp.ne.s32.totalorder %s44, %s60
      %p62 = scmp.eq.s32.totalorder %s22, 0
      %p63 = por %p61, %p62
      %s65 = sadd.s32 %s64, 1
      %p68 = scmp.eq.s32.totalorder %s16, 1
      %p69 = scmp.ne.s32.totalorder %s64, %s66
      %p70 = scmp.eq.s32.totalorder %s16, 0
      %p71 = por %p69, %p70
      %p72 = scmp.ne.s32.totalorder %s64, %s66
      %p73 = scmp.eq.s32.totalorder %s21, 1
      %p74 = por %p72, %p73
      %p75 = scmp.ne.s32.totalorder %s66, %s67
      %p76 = scmp.eq.s32.totalorder %s21, 0
      %p77 = por %p75, %p76
      %p78 = scmp.ne.s32.totalorder %s66, %s67
      %p79 = scmp.eq.s32.totalorder %s22, 1
      %p80 = por %p78, %p79
      %p82 = scmp.ne.s32.totalorder %s67, %s81
      %p83 = scmp.eq.s32.totalorder %s22, 0
      %p84 = por %p82, %p83
      %s85 = ssub.s32 %s23, %s35
      %s86 = ssub.s32 %s24, %s31
      %s87 = sor.u32 %s85, %s86
      %p88 = scmp.eq.s32.totalorder %s87, 0
      %s90 = sadd.s32 %s89, 1
      %s91 = scalar_select %p88, %s89, %s90
      %p94 = pneg %p88
      %p95 = scmp.eq.s32.totalorder %s16, 1
      %p96 = por %p94, %p95
      %p97 = scmp.ne.s32.totalorder %s89, %s92
      %p98 = scmp.eq.s32.totalorder %s16, 0
      %p99 = por %p97, %p98
      %p100 = scmp.ne.s32.totalorder %s89, %s92
      %p101 = scmp.eq.s32.totalorder %s21, 1
      %p102 = por %p100, %p101
      %p103 = scmp.ne.s32.totalorder %s92, %s93
      %p104 = scmp.eq.s32.totalorder %s21, 0
      %p105 = por %p103, %p104
      %p106 = scmp.ne.s32.totalorder %s92, %s93
      %p107 = scmp.eq.s32.totalorder %s22, 1
      %p108 = por %p106, %p107
      %p110 = scmp.ne.s32.totalorder %s93, %s109
      %p111 = scmp.eq.s32.totalorder %s22, 0
      %p112 = por %p110, %p111
      %s113 = ssub.s32 %s23, %s35
      %s114 = ssub.s32 %s24, %s31
      %s115 = sor.u32 %s113, %s114
      %p116 = scmp.eq.s32.totalorder %s115, 0
      %s118 = sadd.s32 %s117, 1
      %s119 = scalar_select %p116, %s117, %s118
      %p122 = pneg %p116
      %p123 = scmp.eq.s32.totalorder %s16, 1
      %p124 = por %p122, %p123
      %p125 = scmp.ne.s32.totalorder %s117, %s120
      %p126 = scmp.eq.s32.totalorder %s16, 0
      %p127 = por %p125, %p126
      %p128 = scmp.ne.s32.totalorder %s117, %s120
      %p129 = scmp.eq.s32.totalorder %s21, 1
      %p130 = por %p128, %p129
      %p131 = scmp.ne.s32.totalorder %s120, %s121
      %p132 = scmp.eq.s32.totalorder %s21, 0
      %p133 = por %p131, %p132
      %p134 = scmp.ne.s32.totalorder %s120, %s121
      %p135 = scmp.eq.s32.totalorder %s22, 1
      %p136 = por %p134, %p135
      %p138 = scmp.ne.s32.totalorder %s121, %s137
      %p139 = scmp.eq.s32.totalorder %s22, 0
      %p140 = por %p138, %p139
      %p141 = scmp.le.s32.totalorder 1, %s16
      %p142 = scmp.lt.s32.totalorder %s16, 3
      %p143 = pnand %p141, %p142
      %p144 = pneg %p143
      // Predicated region
      $region9: #{tpu_custom_call.1} parent=5 // pred_check
        _
      $region10: #{tpu_custom_call.1} parent=5 // pred_check_branch
        %146 = sbr.rel (%p143) target = $region12
      $region11: #{tpu_custom_call.1} parent=5 // pred_region
        %s147 = ssub.s32 %s16, 1
        // Predicated region
        $region13: #{tpu_custom_call.1} parent=11 // pred_check
          %p148 = pneg %p77
        $region14: #{tpu_custom_call.1} parent=11 // pred_check_branch
          %150 = sbr.rel (%p148) target = $region16
        $region15: #{tpu_custom_call.1} parent=11 // pred_region
          _
        $region16: #{tpu_custom_call.1} parent=11 // pred_fallthru
          _
      $region12: #{tpu_custom_call.1} parent=5 // pred_fallthru
        _
      %p151 = scmp.lt.s32.totalorder %s16, 2
      // Predicated region
      $region17: #{tpu_custom_call.1} parent=5 // pred_check
        %p152 = pneg %p151
      $region18: #{tpu_custom_call.1} parent=5 // pred_check_branch
        %154 = sbr.rel (%p152) target = $region20
      $region19: #{tpu_custom_call.1} parent=5 // pred_region
        // Predicated region
        $region21: #{tpu_custom_call.1} parent=19 // pred_check
          %p155 = pneg %p50
        $region22: #{tpu_custom_call.1} parent=19 // pred_check_branch
          %157 = sbr.rel (%p155) target = $region24
        $region23: #{tpu_custom_call.1} parent=19 // pred_region
          %p158 = scmp.lt.s32.totalorder %s23, 1
          %s159 = scalar_select %p158, %s23, 1
          %p160 = scmp.lt.s32.totalorder %s24, 0
          %s161 = scalar_select %p160, %s24, 0
          %s162 = smul.addr %s161, 24
          %s163 = smul.addr %s159, 24
          %s164 = sadd.s32 %s162, %s163
          %s165 = smul.addr %s164, 4
          %s166 = scalar_lea.vmem %s0, %s165
        $region24: #{tpu_custom_call.1} parent=19 // pred_fallthru
          _
      $region20: #{tpu_custom_call.1} parent=5 // pred_fallthru
        _
      %p167 = scmp.le.s32.totalorder 1, %s16
      %p168 = scmp.lt.s32.totalorder %s16, 3
      %p169 = pnand %p167, %p168
      %p170 = pneg %p169
      // Predicated region
      $region25: #{tpu_custom_call.1} parent=5 // pred_check
        _
      $region26: #{tpu_custom_call.1} parent=5 // pred_check_branch
        %172 = sbr.rel (%p169) target = $region28
      $region27: #{tpu_custom_call.1} parent=5 // pred_region
        %s173 = ssub.s32 %s16, 1
        %p174 = scmp.lt.s32.totalorder %s25, 1
        %s175 = scalar_select %p174, %s25, 1
        %p176 = scmp.lt.s32.totalorder %s26, 0
        %s177 = scalar_select %p176, %s26, 0
        %s178 = smul.addr %s177, 24
        %s179 = smul.addr %s175, 24
        %s180 = sadd.s32 %s178, %s179
        %s181 = smul.addr %s180, 4
        %s182 = scalar_lea.vmem %s0, %s181
        %p183 = pneg %p56
        %p184 = pneg %p53
        %p185 = pneg %p77
        %p186 = pneg %p74
        %p187 = pneg %p105
        %p188 = pneg %p102
        %s189 = sand.u32 %s92, 1
        %s190 = scalar_lea.sflag [#allocation3], %s189
        %s191 = sand.u32 %s92, 1
        %s192 = smul.addr %s191, 128
        %s193 = scalar_lea.vmem [#allocation2], %s192
        %p194 = pneg %p133
        %p195 = pneg %p130
        %s196 = sand.u32 %s120, 1
        %s197 = scalar_lea.sflag [#allocation5], %s196
        %s198 = sand.u32 %s120, 1
        %s199 = smul.addr %s198, 2
        %s200 = scalar_lea.vmem [#allocation4], %s199
        %p201 = scmp.lt.s32.totalorder %s25, 1
        %s202 = scalar_select %p201, %s25, 1
        %p203 = scmp.lt.s32.totalorder %s26, 0
        %s204 = scalar_select %p203, %s26, 0
        %s205 = smul.addr %s204, 24
        %s206 = smul.addr %s202, 24
        %s207 = sadd.s32 %s205, %s206
        %s208 = smul.addr %s207, 4
        %s209 = scalar_lea.vmem %s0, %s208
        %s210 = smul.u32 8, %s26
        %v212 = vld [vmem:[%s209] sm:$0xf]
        %v213 = vld [vmem:[%s209 + $0x4] sm:$0x1]
        %v214 = vld [vmem:[%s209 + $0x8] sm:$0xf]
        %v215 = vld [vmem:[%s209 + $0xc] sm:$0x1]
        %v216 = vld [vmem:[%s209 + $0x10] sm:$0xf]
        %v217 = vld [vmem:[%s209 + $0x14] sm:$0x1]
        %v218 = vld [vmem:[%s209 + $0x18] sm:$0xf]
        %v219 = vld [vmem:[%s209 + $0x1c] sm:$0x1]
        %v220 = vld [vmem:[%s209 + $0x20] sm:$0xf]
        %v221 = vld [vmem:[%s209 + $0x24] sm:$0x1]
        %v222 = vld [vmem:[%s209 + $0x28] sm:$0xf]
        %v223 = vld [vmem:[%s209 + $0x2c] sm:$0x1]
        %v224 = vld [vmem:[%s209 + $0x30] sm:$0xf]
        %v225 = vld [vmem:[%s209 + $0x34] sm:$0x1]
        %v226 = vld [vmem:[%s209 + $0x38] sm:$0xf]
        %v227 = vld [vmem:[%s209 + $0x3c] sm:$0x1]
        %v228 = vld [vmem:[%s209 + $0x40] sm:$0xf]
        %v229 = vld [vmem:[%s209 + $0x44] sm:$0x1]
        %v230 = vld [vmem:[%s209 + $0x48] sm:$0xf]
        %v231 = vld [vmem:[%s209 + $0x4c] sm:$0x1]
        %v232 = vld [vmem:[%s209 + $0x50] sm:$0xf]
        %v233 = vld [vmem:[%s209 + $0x54] sm:$0x1]
        %v234 = vld [vmem:[%s209 + $0x58] sm:$0xf]
        %v235 = vld [vmem:[%s209 + $0x5c] sm:$0x1]
        %p236 = scmp.eq.s32.totalorder %s26, 0
        %v257 = vunpack.c.l.b16 %v212
        %v258 = vunpack.c.l.b16 %v213
        %v259 = vunpack.c.l.b16 %v214
        %v260 = vunpack.c.l.b16 %v215
        %v261 = vunpack.c.l.b16 %v216
        %v262 = vunpack.c.l.b16 %v217
        %v263 = vunpack.c.l.b16 %v218
        %v264 = vunpack.c.l.b16 %v219
        %v265 = vunpack.c.l.b16 %v220
        %v266 = vunpack.c.l.b16 %v221
        %v267 = vunpack.c.l.b16 %v222
        %v268 = vunpack.c.l.b16 %v223
        %v269 = vunpack.c.l.b16 %v224
        %v270 = vunpack.c.l.b16 %v225
        %v271 = vunpack.c.l.b16 %v226
        %v272 = vunpack.c.l.b16 %v227
        %v273 = vunpack.c.l.b16 %v228
        %v274 = vunpack.c.l.b16 %v229
        %v275 = vunpack.c.l.b16 %v230
        %v276 = vunpack.c.l.b16 %v231
        %v277 = vpack.c.b16 %v258, %v257
        %v278 = vpack.c.b16 %v260, %v259
        %v279 = vpack.c.b16 %v262, %v261
        %v280 = vpack.c.b16 %v264, %v263
        %v281 = vpack.c.b16 %v266, %v265
        %v282 = vpack.c.b16 %v268, %v267
        %v283 = vpack.c.b16 %v270, %v269
        %v284 = vpack.c.b16 %v272, %v271
        %v285 = vpack.c.b16 %v274, %v273
        %v286 = vpack.c.b16 %v276, %v275
        %v288 = vshrl.u32 %v277, 16
        %v290 = vshll.u32 %v277, 16
        %v292 = vrot.slane %v290, 1
        %v293 = vor.u32 %v288, %v292
        %v295 = vshrl.u32 %v278, 16
        %v297 = vshll.u32 %v278, 16
        %v299 = vrot.slane %v297, 1
        %v300 = vor.u32 %v295, %v299
        %v302 = vshrl.u32 %v279, 16
        %v304 = vshll.u32 %v279, 16
        %v306 = vrot.slane %v304, 1
        %v307 = vor.u32 %v302, %v306
        %v309 = vshrl.u32 %v280, 16
        %v311 = vshll.u32 %v280, 16
        %v313 = vrot.slane %v311, 1
        %v314 = vor.u32 %v309, %v313
        %v316 = vshrl.u32 %v281, 16
        %v318 = vshll.u32 %v281, 16
        %v320 = vrot.slane %v318, 1
        %v321 = vor.u32 %v316, %v320
        %v323 = vshrl.u32 %v282, 16
        %v325 = vshll.u32 %v282, 16
        %v327 = vrot.slane %v325, 1
        %v328 = vor.u32 %v323, %v327
        %v330 = vshrl.u32 %v283, 16
        %v332 = vshll.u32 %v283, 16
        %v334 = vrot.slane %v332, 1
        %v335 = vor.u32 %v330, %v334
        %v337 = vshrl.u32 %v284, 16
        %v339 = vshll.u32 %v284, 16
        %v341 = vrot.slane %v339, 1
        %v342 = vor.u32 %v337, %v341
        %v344 = vshrl.u32 %v285, 16
        %v346 = vshll.u32 %v285, 16
        %v348 = vrot.slane %v346, 1
        %v349 = vor.u32 %v344, %v348
        %v351 = vshrl.u32 %v286, 16
        %v353 = vshll.u32 %v286, 16
        %v355 = vrot.slane %v353, 1
        %v356 = vor.u32 %v351, %v355
        %357 = vrot.lane.b32.xlu0 %v293, 8
        %v358 = vpop.permute.xlu0 %357
        %359 = vrot.lane.b32.xlu0 %v300, 8
        %v360 = vpop.permute.xlu0 %359
        %361 = vrot.lane.b32.xlu0 %v307, 8
        %v362 = vpop.permute.xlu0 %361
        %363 = vrot.lane.b32.xlu0 %v314, 8
        %v364 = vpop.permute.xlu0 %363
        %365 = vrot.lane.b32.xlu0 %v321, 8
        %v366 = vpop.permute.xlu0 %365
        %367 = vrot.lane.b32.xlu0 %v328, 8
        %v368 = vpop.permute.xlu0 %367
        %369 = vrot.lane.b32.xlu0 %v335, 8
        %v370 = vpop.permute.xlu0 %369
        %371 = vrot.lane.b32.xlu0 %v342, 8
        %v372 = vpop.permute.xlu0 %371
        %373 = vrot.lane.b32.xlu0 %v349, 8
        %v374 = vpop.permute.xlu0 %373
        %375 = vrot.lane.b32.xlu0 %v356, 8
        %v376 = vpop.permute.xlu0 %375
        %v378 = vunpack.c.l.b16 %v232
        %v379 = vpack.c.b16 %v259, %v259
        %v380 = vpack.c.b16 %v261, %v261
        %v381 = vpack.c.b16 %v263, %v263
        %v382 = vpack.c.b16 %v265, %v265
        %v383 = vpack.c.b16 %v267, %v267
        %v384 = vpack.c.b16 %v269, %v269
        %v385 = vpack.c.b16 %v271, %v271
        %v386 = vpack.c.b16 %v273, %v273
        %v387 = vpack.c.b16 %v275, %v275
        %v388 = vpack.c.b16 %v378, %v378
        %389 = vrot.lane.b32.xlu0 %v379, 16
        %v390 = vpop.permute.xlu0 %389
        %391 = vrot.lane.b32.xlu0 %v380, 16
        %v392 = vpop.permute.xlu0 %391
        %393 = vrot.lane.b32.xlu0 %v381, 16
        %v394 = vpop.permute.xlu0 %393
        %395 = vrot.lane.b32.xlu0 %v382, 16
        %v396 = vpop.permute.xlu0 %395
        %397 = vrot.lane.b32.xlu0 %v383, 16
        %v398 = vpop.permute.xlu0 %397
        %399 = vrot.lane.b32.xlu0 %v384, 16
        %v400 = vpop.permute.xlu0 %399
        %401 = vrot.lane.b32.xlu0 %v385, 16
        %v402 = vpop.permute.xlu0 %401
        %403 = vrot.lane.b32.xlu0 %v386, 16
        %v404 = vpop.permute.xlu0 %403
        %405 = vrot.lane.b32.xlu0 %v387, 16
        %v406 = vpop.permute.xlu0 %405
        %407 = vrot.lane.b32.xlu0 %v388, 16
        %v408 = vpop.permute.xlu0 %407
        %v410 = vunpack.c.l.b16 %v233
        %v411 = vpack.c.b16 %v410, %v378
        %v413 = vshrl.u32 %v411, 16
        %v415 = vshll.u32 %v411, 16
        %v417 = vrot.slane %v415, 1
        %v418 = vor.u32 %v413, %v417
        %419 = vrot.lane.b32.xlu0 %v300, 24
        %v420 = vpop.permute.xlu0 %419
        %421 = vrot.lane.b32.xlu0 %v307, 24
        %v422 = vpop.permute.xlu0 %421
        %423 = vrot.lane.b32.xlu0 %v314, 24
        %v424 = vpop.permute.xlu0 %423
        %425 = vrot.lane.b32.xlu0 %v321, 24
        %v426 = vpop.permute.xlu0 %425
        %427 = vrot.lane.b32.xlu0 %v328, 24
        %v428 = vpop.permute.xlu0 %427
        %429 = vrot.lane.b32.xlu0 %v335, 24
        %v430 = vpop.permute.xlu0 %429
        %431 = vrot.lane.b32.xlu0 %v342, 24
        %v432 = vpop.permute.xlu0 %431
        %433 = vrot.lane.b32.xlu0 %v349, 24
        %v434 = vpop.permute.xlu0 %433
        %435 = vrot.lane.b32.xlu0 %v356, 24
        %v436 = vpop.permute.xlu0 %435
        %437 = vrot.lane.b32.xlu0 %v418, 24
        %v438 = vpop.permute.xlu0 %437
        %vm439 = vcmask 64512
        %v442 = vsel %vm439, %v212, %v358
        %v445 = vsel %vm439, %v214, %v360
        %v448 = vsel %vm439, %v216, %v362
        %v451 = vsel %vm439, %v218, %v364
        %v454 = vsel %vm439, %v220, %v366
        %v457 = vsel %vm439, %v222, %v368
        %v460 = vsel %vm439, %v224, %v370
        %v463 = vsel %vm439, %v226, %v372
        %v466 = vsel %vm439, %v228, %v374
        %v469 = vsel %vm439, %v230, %v376
        %vm470 = vcmask 130048
        %v472 = vsel %vm470, %v442, %v390
        %v474 = vsel %vm470, %v445, %v392
        %v476 = vsel %vm470, %v448, %v394
        %v478 = vsel %vm470, %v451, %v396
        %v480 = vsel %vm470, %v454, %v398
        %v482 = vsel %vm470, %v457, %v400
        %v484 = vsel %vm470, %v460, %v402
        %v486 = vsel %vm470, %v463, %v404
        %v488 = vsel %vm470, %v466, %v406
        %v490 = vsel %vm470, %v469, %v408
        %vm491 = vcmask 195584
        %v493 = vsel %vm491, %v472, %v420
        %v495 = vsel %vm491, %v474, %v422
        %v497 = vsel %vm491, %v476, %v424
        %v499 = vsel %vm491, %v478, %v426
        %v501 = vsel %vm491, %v480, %v428
        %v503 = vsel %vm491, %v482, %v430
        %v505 = vsel %vm491, %v484, %v432
        %v507 = vsel %vm491, %v486, %v434
        %v509 = vsel %vm491, %v488, %v436
        %v511 = vsel %vm491, %v490, %v438
        %v512 = vld [vmem:[%s1] sm:$0xf]
        %v513 = vld [vmem:[%s1 + $0x4] sm:$0xf]
        %v514 = vld [vmem:[%s1 + $0x8] sm:$0xf]
        %v515 = vld [vmem:[%s1 + $0xc] sm:$0xf]
        %v526 = vunpack.c.l.b16 %v493
        %v527 = vunpack.c.l.b16 %v495
        %v528 = vunpack.c.l.b16 %v497
        %v529 = vunpack.c.l.b16 %v499
        %v530 = vunpack.c.l.b16 %v501
        %v531 = vunpack.c.l.b16 %v503
        %v532 = vunpack.c.l.b16 %v505
        %v533 = vunpack.c.l.b16 %v507
        %v534 = vunpack.c.l.b16 %v509
        %v535 = vunpack.c.l.b16 %v511
        %v536 = vpack.c.b16 %v527, %v526
        %v537 = vpack.c.b16 %v529, %v528
        %v538 = vpack.c.b16 %v531, %v530
        %v539 = vpack.c.b16 %v533, %v532
        %v540 = vpack.c.b16 %v535, %v534
        %v545 = vunpack.c.l.b16 %v512
        %v546 = vunpack.c.l.b16 %v513
        %v547 = vunpack.c.l.b16 %v514
        %v548 = vunpack.c.l.b16 %v515
        %v549 = vpack.c.b16 %v546, %v545
        %v550 = vpack.c.b16 %v548, %v547
        %vm553 = vcmask 261120
        %v555 = vsel %vm553, %v536, 0
        %v558 = vsel %vm553, %v537, 0
        %v561 = vsel %vm553, %v538, 0
        %v564 = vsel %vm553, %v539, 0
        %v567 = vsel %vm553, %v540, 0
        %569 = vmatprep.subr.bf16.mxu0 0
        %570 = vmatpush1.bf16.msra.mxu0 %v549
        %571 = vmatprep.subr.bf16.mxu0 0
        %572 = vmatpush1.bf16.msra.mxu0 %v550
        %573 = vmatprep.subr.bf16.mxu0 0
        %574 = vmatpush1.bf16.msra.mxu0 0
        %575 = vmatprep.subr.bf16.mxu0 0
        %576 = vmatpush1.bf16.msra.mxu0 0
        %577 = vmatprep.subr.bf16.mxu0 0
        %578 = vmatpush1.bf16.msra.mxu0 0
        %579 = vmatprep.subr.bf16.mxu0 0
        %580 = vmatpush1.bf16.msra.mxu0 0
        %581 = vmatprep.subr.bf16.mxu0 0
        %582 = vmatpush1.bf16.msra.mxu0 0
        %583 = vmatprep.subr.bf16.mxu0 0
        %584 = vmatpush1.bf16.msra.mxu0 0
        %585 = vmatprep.subr.bf16.mxu0 0
        %586 = vmatpush1.bf16.msra.mxu0 0
        %587 = vmatprep.subr.bf16.mxu0 0
        %588 = vmatpush1.bf16.msra.mxu0 0
        %589 = vmatprep.subr.bf16.mxu0 0
        %590 = vmatpush1.bf16.msra.mxu0 0
        %591 = vmatprep.subr.bf16.mxu0 0
        %592 = vmatpush1.bf16.msra.mxu0 0
        %593 = vmatprep.subr.bf16.mxu0 0
        %594 = vmatpush1.bf16.msra.mxu0 0
        %595 = vmatprep.subr.bf16.mxu0 0
        %596 = vmatpush1.bf16.msra.mxu0 0
        %597 = vmatprep.subr.bf16.mxu0 0
        %598 = vmatpush1.bf16.msra.mxu0 0
        %599 = vmatprep.subr.bf16.mxu0 0
        %600 = vmatpush1.bf16.msra.mxu0 0
        %601 = vmatprep.mubr.bf16.mxu0 0
        %602 = vmatmul.mubr.bf16.gmra.mrb[0].mxu0 %v555
        %v603 = vpop.f32.mrb[0].mxu0
        %v604 = vpop.f32.mrb[0].mxu0
        %v605 = vpop.f32.mrb[0].mxu0
        %v606 = vadd.f32 0.0, %v605
        %v607 = vpop.f32.mrb[0].mxu0
        %608 = vmatprep.mubr.bf16.mxu0 0
        %609 = vmatmul.mubr.bf16.gmra.mrb[0].mxu0 %v558
        %v610 = vpop.f32.mrb[0].mxu0
        %v611 = vadd.f32 0.0, %v610
        %v612 = vpop.f32.mrb[0].mxu0
        %v613 = vpop.f32.mrb[0].mxu0
        %v614 = vadd.f32 0.0, %v613
        %v615 = vpop.f32.mrb[0].mxu0
        %616 = vmatprep.mubr.bf16.mxu0 0
        %617 = vmatmul.mubr.bf16.gmra.mrb[0].mxu0 %v561
        %v618 = vpop.f32.mrb[0].mxu0
        %v619 = vadd.f32 0.0, %v618
        %v620 = vpop.f32.mrb[0].mxu0
        %v621 = vpop.f32.mrb[0].mxu0
        %v622 = vadd.f32 0.0, %v621
        %v623 = vpop.f32.mrb[0].mxu0
        %624 = vmatprep.mubr.bf16.mxu0 0
        %625 = vmatmul.mubr.bf16.gmra.mrb[0].mxu0 %v564
        %v626 = vpop.f32.mrb[0].mxu0
        %v627 = vadd.f32 0.0, %v626
        %v628 = vpop.f32.mrb[0].mxu0
        %v629 = vpop.f32.mrb[0].mxu0
        %v630 = vadd.f32 0.0, %v629
        %v631 = vpop.f32.mrb[0].mxu0
        %632 = vmatprep.mubr.bf16.mxu0 0
        %633 = vmatmul.mubr.bf16.gmra.mrb[0].mxu0 %v567
        %v634 = vpop.f32.mrb[0].mxu0
        %v635 = vadd.f32 0.0, %v634
        %v636 = vpop.f32.mrb[0].mxu0
        %v637 = vpop.f32.mrb[0].mxu0
        %v638 = vadd.f32 0.0, %v637
        %v639 = vpop.f32.mrb[0].mxu0
        %640 = vdwg.mxu0
        %641 = vrot.lane.b32.xlu0 %v278, 16
        %v642 = vpop.permute.xlu0 %641
        %643 = vrot.lane.b32.xlu0 %v279, 16
        %v644 = vpop.permute.xlu0 %643
        %645 = vrot.lane.b32.xlu0 %v280, 16
        %v646 = vpop.permute.xlu0 %645
        %647 = vrot.lane.b32.xlu0 %v281, 16
        %v648 = vpop.permute.xlu0 %647
        %649 = vrot.lane.b32.xlu0 %v282, 16
        %v650 = vpop.permute.xlu0 %649
        %651 = vrot.lane.b32.xlu0 %v283, 16
        %v652 = vpop.permute.xlu0 %651
        %653 = vrot.lane.b32.xlu0 %v284, 16
        %v654 = vpop.permute.xlu0 %653
        %655 = vrot.lane.b32.xlu0 %v285, 16
        %v656 = vpop.permute.xlu0 %655
        %657 = vrot.lane.b32.xlu0 %v286, 16
        %v658 = vpop.permute.xlu0 %657
        %659 = vrot.lane.b32.xlu0 %v411, 16
        %v660 = vpop.permute.xlu0 %659
        %v661 = vsel %vm439, %v277, %v358
        %v662 = vsel %vm439, %v278, %v360
        %v663 = vsel %vm439, %v279, %v362
        %v664 = vsel %vm439, %v280, %v364
        %v665 = vsel %vm439, %v281, %v366
        %v666 = vsel %vm439, %v282, %v368
        %v667 = vsel %vm439, %v283, %v370
        %v668 = vsel %vm439, %v284, %v372
        %v669 = vsel %vm439, %v285, %v374
        %v670 = vsel %vm439, %v286, %v376
        %v672 = vsel %vm470, %v661, %v642
        %v674 = vsel %vm470, %v662, %v644
        %v676 = vsel %vm470, %v663, %v646
        %v678 = vsel %vm470, %v664, %v648
        %v680 = vsel %vm470, %v665, %v650
        %v682 = vsel %vm470, %v666, %v652
        %v684 = vsel %vm470, %v667, %v654
        %v686 = vsel %vm470, %v668, %v656
        %v688 = vsel %vm470, %v669, %v658
        %v690 = vsel %vm470, %v670, %v660
        %v691 = vsel %vm491, %v672, %v420
        %v692 = vsel %vm491, %v674, %v422
        %v693 = vsel %vm491, %v676, %v424
        %v694 = vsel %vm491, %v678, %v426
        %v695 = vsel %vm491, %v680, %v428
        %v696 = vsel %vm491, %v682, %v430
        %v697 = vsel %vm491, %v684, %v432
        %v698 = vsel %vm491, %v686, %v434
        %v699 = vsel %vm491, %v688, %v436
        %v700 = vsel %vm491, %v690, %v438
        %v711 = vunpack.c.l.b16 %v691
        %v712 = vunpack.c.h.b16 %v691
        %v713 = vunpack.c.l.b16 %v692
        %v714 = vunpack.c.h.b16 %v692
        %v715 = vunpack.c.l.b16 %v693
        %v716 = vunpack.c.h.b16 %v693
        %v717 = vunpack.c.l.b16 %v694
        %v718 = vunpack.c.h.b16 %v694
        %v719 = vunpack.c.l.b16 %v695
        %v720 = vunpack.c.h.b16 %v695
        %v721 = vunpack.c.l.b16 %v696
        %v722 = vunpack.c.h.b16 %v696
        %v723 = vunpack.c.l.b16 %v697
        %v724 = vunpack.c.h.b16 %v697
        %v725 = vunpack.c.l.b16 %v698
        %v726 = vunpack.c.h.b16 %v698
        %v727 = vunpack.c.l.b16 %v699
        %v728 = vunpack.c.h.b16 %v699
        %v729 = vunpack.c.l.b16 %v700
        %v730 = vunpack.c.h.b16 %v700
        %v731 = vpack.c.b16 %v711, %v711
        %v732 = vpack.c.b16 %v712, %v712
        %v733 = vpack.c.b16 %v713, %v713
        %v734 = vpack.c.b16 %v714, %v714
        %v735 = vpack.c.b16 %v715, %v715
        %v736 = vpack.c.b16 %v716, %v716
        %v737 = vpack.c.b16 %v717, %v717
        %v738 = vpack.c.b16 %v718, %v718
        %v739 = vpack.c.b16 %v719, %v719
        %v740 = vpack.c.b16 %v720, %v720
        %v741 = vpack.c.b16 %v721, %v721
        %v742 = vpack.c.b16 %v722, %v722
        %v743 = vpack.c.b16 %v723, %v723
        %v744 = vpack.c.b16 %v724, %v724
        %v745 = vpack.c.b16 %v725, %v725
        %v746 = vpack.c.b16 %v726, %v726
        %v747 = vpack.c.b16 %v727, %v727
        %v748 = vpack.c.b16 %v728, %v728
        %v749 = vpack.c.b16 %v729, %v729
        %v750 = vpack.c.b16 %v730, %v730
        %vm751 = vsmask.f32 3328
        %vm752 = vsmask.f32 7440
        %vm753 = vmor %vm751, %vm752
        %v755 = vshrl.u32 %v731, 16
        %v757 = vrot.slane %v755, 4
        %v758 = vshll.u32 %v731, 16
        %v760 = vrot.slane %v758, 5
        %v761 = vor.u32 %v757, %v760
        %v762 = vrot.slane %v761, 4
        %v764 = vshll.u32 %v732, 16
        %v766 = vrot.slane %v764, 5
        %v767 = vsel %vm753, %v762, %v766
        %v769 = vshrl.u32 %v733, 16
        %v771 = vrot.slane %v769, 4
        %v772 = vshll.u32 %v733, 16
        %v774 = vrot.slane %v772, 5
        %v775 = vor.u32 %v771, %v774
        %v776 = vrot.slane %v775, 4
        %v778 = vshll.u32 %v734, 16
        %v780 = vrot.slane %v778, 5
        %v781 = vsel %vm753, %v776, %v780
        %v783 = vshrl.u32 %v735, 16
        %v785 = vrot.slane %v783, 4
        %v786 = vshll.u32 %v735, 16
        %v788 = vrot.slane %v786, 5
        %v789 = vor.u32 %v785, %v788
        %v790 = vrot.slane %v789, 4
        %v792 = vshll.u32 %v736, 16
        %v794 = vrot.slane %v792, 5
        %v795 = vsel %vm753, %v790, %v794
        %v797 = vshrl.u32 %v737, 16
        %v799 = vrot.slane %v797, 4
        %v800 = vshll.u32 %v737, 16
        %v802 = vrot.slane %v800, 5
        %v803 = vor.u32 %v799, %v802
        %v804 = vrot.slane %v803, 4
        %v806 = vshll.u32 %v738, 16
        %v808 = vrot.slane %v806, 5
        %v809 = vsel %vm753, %v804, %v808
        %v811 = vshrl.u32 %v739, 16
        %v813 = vrot.slane %v811, 4
        %v814 = vshll.u32 %v739, 16
        %v816 = vrot.slane %v814, 5
        %v817 = vor.u32 %v813, %v816
        %v818 = vrot.slane %v817, 4
        %v820 = vshll.u32 %v740, 16
        %v822 = vrot.slane %v820, 5
        %v823 = vsel %vm753, %v818, %v822
        %v825 = vshrl.u32 %v741, 16
        %v827 = vrot.slane %v825, 4
        %v828 = vshll.u32 %v741, 16
        %v830 = vrot.slane %v828, 5
        %v831 = vor.u32 %v827, %v830
        %v832 = vrot.slane %v831, 4
        %v834 = vshll.u32 %v742, 16
        %v836 = vrot.slane %v834, 5
        %v837 = vsel %vm753, %v832, %v836
        %v839 = vshrl.u32 %v743, 16
        %v841 = vrot.slane %v839, 4
        %v842 = vshll.u32 %v743, 16
        %v844 = vrot.slane %v842, 5
        %v845 = vor.u32 %v841, %v844
        %v846 = vrot.slane %v845, 4
        %v848 = vshll.u32 %v744, 16
        %v850 = vrot.slane %v848, 5
        %v851 = vsel %vm753, %v846, %v850
        %v853 = vshrl.u32 %v745, 16
        %v855 = vrot.slane %v853, 4
        %v856 = vshll.u32 %v745, 16
        %v858 = vrot.slane %v856, 5
        %v859 = vor.u32 %v855, %v858
        %v860 = vrot.slane %v859, 4
        %v862 = vshll.u32 %v746, 16
        %v864 = vrot.slane %v862, 5
        %v865 = vsel %vm753, %v860, %v864
        %v867 = vshrl.u32 %v747, 16
        %v869 = vrot.slane %v867, 4
        %v870 = vshll.u32 %v747, 16
        %v872 = vrot.slane %v870, 5
        %v873 = vor.u32 %v869, %v872
        %v874 = vrot.slane %v873, 4
        %v876 = vshll.u32 %v748, 16
        %v878 = vrot.slane %v876, 5
        %v879 = vsel %vm753, %v874, %v878
        %v881 = vshrl.u32 %v749, 16
        %v883 = vrot.slane %v881, 4
        %v884 = vshll.u32 %v749, 16
        %v886 = vrot.slane %v884, 5
        %v887 = vor.u32 %v883, %v886
        %v888 = vrot.slane %v887, 4
        %v890 = vshll.u32 %v750, 16
        %v892 = vrot.slane %v890, 5
        %v893 = vsel %vm753, %v888, %v892
        %s894 = scalar_lea.vmem %s1, 16
        %v895 = vld [vmem:[%s894] sm:$0xf]
        %v896 = vld [vmem:[%s894 + $0x4] sm:$0xf]
        %v897 = vld [vmem:[%s894 + $0x8] sm:$0xf]
        %v898 = vld [vmem:[%s894 + $0xc] sm:$0xf]
        %v899 = vunpack.c.l.b16 %v767
        %v900 = vunpack.c.l.b16 %v781
        %v901 = vunpack.c.l.b16 %v795
        %v902 = vunpack.c.l.b16 %v809
        %v903 = vunpack.c.l.b16 %v823
        %v904 = vunpack.c.l.b16 %v837
        %v905 = vunpack.c.l.b16 %v851
        %v906 = vunpack.c.l.b16 %v865
        %v907 = vunpack.c.l.b16 %v879
        %v908 = vunpack.c.l.b16 %v893
        %v909 = vpack.c.b16 %v900, %v899
        %v910 = vpack.c.b16 %v902, %v901
        %v911 = vpack.c.b16 %v904, %v903
        %v912 = vpack.c.b16 %v906, %v905
        %v913 = vpack.c.b16 %v908, %v907
        %v918 = vunpack.c.l.b16 %v895
        %v919 = vunpack.c.l.b16 %v896
        %v920 = vunpack.c.l.b16 %v897
        %v921 = vunpack.c.l.b16 %v898
        %v922 = vpack.c.b16 %v919, %v918
        %v923 = vpack.c.b16 %v921, %v920
        %v927 = vsel %vm553, %v909, 0
        %v930 = vsel %vm553, %v910, 0
        %v933 = vsel %vm553, %v911, 0
        %v936 = vsel %vm553, %v912, 0
        %v939 = vsel %vm553, %v913, 0
        %941 = vmatprep.subr.bf16.mxu0 0
        %942 = vmatpush1.bf16.msra.mxu0 %v922
        %943 = vmatprep.subr.bf16.mxu0 0
        %944 = vmatpush1.bf16.msra.mxu0 %v923
        %945 = vmatprep.subr.bf16.mxu0 0
        %946 = vmatpush1.bf16.msra.mxu0 0
        %947 = vmatprep.subr.bf16.mxu0 0
        %948 = vmatpush1.bf16.msra.mxu0 0
        %949 = vmatprep.subr.bf16.mxu0 0
        %950 = vmatpush1.bf16.msra.mxu0 0
        %951 = vmatprep.subr.bf16.mxu0 0
        %952 = vmatpush1.bf16.msra.mxu0 0
        %953 = vmatprep.subr.bf16.mxu0 0
        %954 = vmatpush1.bf16.msra.mxu0 0
        %955 = vmatprep.subr.bf16.mxu0 0
        %956 = vmatpush1.bf16.msra.mxu0 0
        %957 = vmatprep.subr.bf16.mxu0 0
        %958 = vmatpush1.bf16.msra.mxu0 0
        %959 = vmatprep.subr.bf16.mxu0 0
        %960 = vmatpush1.bf16.msra.mxu0 0
        %961 = vmatprep.subr.bf16.mxu0 0
        %962 = vmatpush1.bf16.msra.mxu0 0
        %963 = vmatprep.subr.bf16.mxu0 0
        %964 = vmatpush1.bf16.msra.mxu0 0
        %965 = vmatprep.subr.bf16.mxu0 0
        %966 = vmatpush1.bf16.msra.mxu0 0
        %967 = vmatprep.subr.bf16.mxu0 0
        %968 = vmatpush1.bf16.msra.mxu0 0
        %969 = vmatprep.subr.bf16.mxu0 0
        %970 = vmatpush1.bf16.msra.mxu0 0
        %971 = vmatprep.subr.bf16.mxu0 0
        %972 = vmatpush1.bf16.msra.mxu0 0
        %973 = vmatprep.mubr.bf16.mxu0 0
        %974 = vmatmul.mubr.bf16.gmra.mrb[0].mxu0 %v927
        %v975 = vpop.f32.mrb[0].mxu0
        %v976 = vpop.f32.mrb[0].mxu0
        %v977 = vpop.f32.mrb[0].mxu0
        %v978 = vadd.f32 0.0, %v977
        %v979 = vpop.f32.mrb[0].mxu0
        %980 = vmatprep.mubr.bf16.mxu0 0
        %981 = vmatmul.mubr.bf16.gmra.mrb[0].mxu0 %v930
        %v982 = vpop.f32.mrb[0].mxu0
        %v983 = vadd.f32 0.0, %v982
        %v984 = vpop.f32.mrb[0].mxu0
        %v985 = vpop.f32.mrb[0].mxu0
        %v986 = vadd.f32 0.0, %v985
        %v987 = vpop.f32.mrb[0].mxu0
        %988 = vmatprep.mubr.bf16.mxu0 0
        %989 = vmatmul.mubr.bf16.gmra.mrb[0].mxu0 %v933
        %v990 = vpop.f32.mrb[0].mxu0
        %v991 = vadd.f32 0.0, %v990
        %v992 = vpop.f32.mrb[0].mxu0
        %v993 = vpop.f32.mrb[0].mxu0
        %v994 = vadd.f32 0.0, %v993
        %v995 = vpop.f32.mrb[0].mxu0
        %996 = vmatprep.mubr.bf16.mxu0 0
        %997 = vmatmul.mubr.bf16.gmra.mrb[0].mxu0 %v936
        %v998 = vpop.f32.mrb[0].mxu0
        %v999 = vadd.f32 0.0, %v998
        %v1000 = vpop.f32.mrb[0].mxu0
        %v1001 = vpop.f32.mrb[0].mxu0
        %v1002 = vadd.f32 0.0, %v1001
        %v1003 = vpop.f32.mrb[0].mxu0
        %1004 = vmatprep.mubr.bf16.mxu0 0
        %1005 = vmatmul.mubr.bf16.gmra.mrb[0].mxu0 %v939
        %v1006 = vpop.f32.mrb[0].mxu0
        %v1007 = vadd.f32 0.0, %v1006
        %v1008 = vpop.f32.mrb[0].mxu0
        %v1009 = vpop.f32.mrb[0].mxu0
        %v1010 = vadd.f32 0.0, %v1009
        %v1011 = vpop.f32.mrb[0].mxu0
        %1012 = vdwg.mxu0
        %1013 = vrot.lane.b32.xlu0 %v418, 8
        %v1014 = vpop.permute.xlu0 %1013
        %v1016 = vunpack.c.l.b16 %v234
        %v1017 = vpack.c.b16 %v1016, %v1016
        %1018 = vrot.lane.b32.xlu0 %v1017, 16
        %v1019 = vpop.permute.xlu0 %1018
        %v1021 = vunpack.c.l.b16 %v235
        %v1022 = vpack.c.b16 %v1021, %v1016
        %v1024 = vshrl.u32 %v1022, 16
        %v1026 = vshll.u32 %v1022, 16
        %v1028 = vrot.slane %v1026, 1
        %v1029 = vor.u32 %v1024, %v1028
        %1030 = vrot.lane.b32.xlu0 %v1029, 24
        %v1031 = vpop.permute.xlu0 %1030
        %v1034 = vsel %vm439, %v232, %v1014
        %v1036 = vsel %vm470, %v1034, %v1019
        %v1038 = vsel %vm491, %v1036, %v1031
        %s1039 = scalar_lea.vmem %s1, 32
        %v1040 = vld [vmem:[%s1039] sm:$0xf]
        %v1041 = vld [vmem:[%s1039 + $0x4] sm:$0xf]
        %v1042 = vld [vmem:[%s1039 + $0x8] sm:$0xf]
        %v1043 = vld [vmem:[%s1039 + $0xc] sm:$0xf]
        %v1045 = vunpack.c.l.b16 %v1038
        %v1046 = vpack.c.b16 %v528, %v527
        %v1047 = vpack.c.b16 %v530, %v529
        %v1048 = vpack.c.b16 %v532, %v531
        %v1049 = vpack.c.b16 %v534, %v533
        %v1050 = vpack.c.b16 %v1045, %v535
        %v1055 = vunpack.c.l.b16 %v1040
        %v1056 = vunpack.c.l.b16 %v1041
        %v1057 = vunpack.c.l.b16 %v1042
        %v1058 = vunpack.c.l.b16 %v1043
        %v1059 = vpack.c.b16 %v1056, %v1055
        %v1060 = vpack.c.b16 %v1058, %v1057
        %v1064 = vsel %vm553, %v1046, 0
        %v1067 = vsel %vm553, %v1047, 0
        %v1070 = vsel %vm553, %v1048, 0
        %v1073 = vsel %vm553, %v1049, 0
        %v1076 = vsel %vm553, %v1050, 0
        %1078 = vmatprep.subr.bf16.mxu0 0
        %1079 = vmatpush1.bf16.msra.mxu0 %v1059
        %1080 = vmatprep.subr.bf16.mxu0 0
        %1081 = vmatpush1.bf16.msra.mxu0 %v1060
        %1082 = vmatprep.subr.bf16.mxu0 0
        %1083 = vmatpush1.bf16.msra.mxu0 0
        %1084 = vmatprep.subr.bf16.mxu0 0
        %1085 = vmatpush1.bf16.msra.mxu0 0
        %1086 = vmatprep.subr.bf16.mxu0 0
        %1087 = vmatpush1.bf16.msra.mxu0 0
        %1088 = vmatprep.subr.bf16.mxu0 0
        %1089 = vmatpush1.bf16.msra.mxu0 0
        %1090 = vmatprep.subr.bf16.mxu0 0
        %1091 = vmatpush1.bf16.msra.mxu0 0
        %1092 = vmatprep.subr.bf16.mxu0 0
        %1093 = vmatpush1.bf16.msra.mxu0 0
        %1094 = vmatprep.subr.bf16.mxu0 0
        %1095 = vmatpush1.bf16.msra.mxu0 0
        %1096 = vmatprep.subr.bf16.mxu0 0
        %1097 = vmatpush1.bf16.msra.mxu0 0
        %1098 = vmatprep.subr.bf16.mxu0 0
        %1099 = vmatpush1.bf16.msra.mxu0 0
        %1100 = vmatprep.subr.bf16.mxu0 0
        %1101 = vmatpush1.bf16.msra.mxu0 0
        %1102 = vmatprep.subr.bf16.mxu0 0
        %1103 = vmatpush1.bf16.msra.mxu0 0
        %1104 = vmatprep.subr.bf16.mxu0 0
        %1105 = vmatpush1.bf16.msra.mxu0 0
        %1106 = vmatprep.subr.bf16.mxu0 0
        %1107 = vmatpush1.bf16.msra.mxu0 0
        %1108 = vmatprep.subr.bf16.mxu0 0
        %1109 = vmatpush1.bf16.msra.mxu0 0
        %1110 = vmatprep.mubr.bf16.mxu0 0
        %1111 = vmatmul.mubr.bf16.gmra.mrb[0].mxu0 %v1064
        %v1112 = vpop.f32.mrb[0].mxu0
        %v1113 = vadd.f32 0.0, %v1112
        %v1114 = vpop.f32.mrb[0].mxu0
        %v1115 = vpop.f32.mrb[0].mxu0
        %v1116 = vadd.f32 0.0, %v1115
        %v1117 = vpop.f32.mrb[0].mxu0
        %1118 = vmatprep.mubr.bf16.mxu0 0
        %1119 = vmatmul.mubr.bf16.gmra.mrb[0].mxu0 %v1067
        %v1120 = vpop.f32.mrb[0].mxu0
        %v1121 = vadd.f32 0.0, %v1120
        %v1122 = vpop.f32.mrb[0].mxu0
        %v1123 = vpop.f32.mrb[0].mxu0
        %v1124 = vadd.f32 0.0, %v1123
        %v1125 = vpop.f32.mrb[0].mxu0
        %1126 = vmatprep.mubr.bf16.mxu0 0
        %1127 = vmatmul.mubr.bf16.gmra.mrb[0].mxu0 %v1070
        %v1128 = vpop.f32.mrb[0].mxu0
        %v1129 = vadd.f32 0.0, %v1128
        %v1130 = vpop.f32.mrb[0].mxu0
        %v1131 = vpop.f32.mrb[0].mxu0
        %v1132 = vadd.f32 0.0, %v1131
        %v1133 = vpop.f32.mrb[0].mxu0
        %1134 = vmatprep.mubr.bf16.mxu0 0
        %1135 = vmatmul.mubr.bf16.gmra.mrb[0].mxu0 %v1073
        %v1136 = vpop.f32.mrb[0].mxu0
        %v1137 = vadd.f32 0.0, %v1136
        %v1138 = vpop.f32.mrb[0].mxu0
        %v1139 = vpop.f32.mrb[0].mxu0
        %v1140 = vadd.f32 0.0, %v1139
        %v1141 = vpop.f32.mrb[0].mxu0
        %1142 = vmatprep.mubr.bf16.mxu0 0
        %1143 = vmatmul.mubr.bf16.gmra.mrb[0].mxu0 %v1076
        %v1144 = vpop.f32.mrb[0].mxu0
        %v1145 = vadd.f32 0.0, %v1144
        %v1146 = vpop.f32.mrb[0].mxu0
        %v1147 = vpop.f32.mrb[0].mxu0
        %v1148 = vadd.f32 0.0, %v1147
        %v1149 = vpop.f32.mrb[0].mxu0
        %1150 = vdwg.mxu0
        %1151 = vrot.lane.b32.xlu0 %v1022, 16
        %v1152 = vpop.permute.xlu0 %1151
        %v1153 = vsel %vm439, %v411, %v1014
        %v1155 = vsel %vm470, %v1153, %v1152
        %v1156 = vsel %vm491, %v1155, %v1031
        %v1158 = vunpack.c.l.b16 %v1156
        %v1159 = vunpack.c.h.b16 %v1156
        %v1160 = vpack.c.b16 %v1158, %v1158
        %v1161 = vpack.c.b16 %v1159, %v1159
        %v1163 = vshrl.u32 %v1160, 16
        %v1165 = vrot.slane %v1163, 4
        %v1166 = vshll.u32 %v1160, 16
        %v1168 = vrot.slane %v1166, 5
        %v1169 = vor.u32 %v1165, %v1168
        %v1170 = vrot.slane %v1169, 4
        %v1172 = vshll.u32 %v1161, 16
        %v1174 = vrot.slane %v1172, 5
        %v1175 = vsel %vm753, %v1170, %v1174
        %s1176 = scalar_lea.vmem %s1, 48
        %v1177 = vld [vmem:[%s1176] sm:$0xf]
        %v1178 = vld [vmem:[%s1176 + $0x4] sm:$0xf]
        %v1179 = vld [vmem:[%s1176 + $0x8] sm:$0xf]
        %v1180 = vld [vmem:[%s1176 + $0xc] sm:$0xf]
        %v1181 = vunpack.c.l.b16 %v1175
        %v1182 = vpack.c.b16 %v901, %v900
        %v1183 = vpack.c.b16 %v903, %v902
        %v1184 = vpack.c.b16 %v905, %v904
        %v1185 = vpack.c.b16 %v907, %v906
        %v1186 = vpack.c.b16 %v1181, %v908
        %v1191 = vunpack.c.l.b16 %v1177
        %v1192 = vunpack.c.l.b16 %v1178
        %v1193 = vunpack.c.l.b16 %v1179
        %v1194 = vunpack.c.l.b16 %v1180
        %v1195 = vpack.c.b16 %v1192, %v1191
        %v1196 = vpack.c.b16 %v1194, %v1193
        %v1200 = vsel %vm553, %v1182, 0
        %v1203 = vsel %vm553, %v1183, 0
        %v1206 = vsel %vm553, %v1184, 0
        %v1209 = vsel %vm553, %v1185, 0
        %v1212 = vsel %vm553, %v1186, 0
        %1214 = vmatprep.subr.bf16.mxu0 0
        %1215 = vmatpush1.bf16.msra.mxu0 %v1195
        %1216 = vmatprep.subr.bf16.mxu0 0
        %1217 = vmatpush1.bf16.msra.mxu0 %v1196
        %1218 = vmatprep.subr.bf16.mxu0 0
        %1219 = vmatpush1.bf16.msra.mxu0 0
        %1220 = vmatprep.subr.bf16.mxu0 0
        %1221 = vmatpush1.bf16.msra.mxu0 0
        %1222 = vmatprep.subr.bf16.mxu0 0
        %1223 = vmatpush1.bf16.msra.mxu0 0
        %1224 = vmatprep.subr.bf16.mxu0 0
        %1225 = vmatpush1.bf16.msra.mxu0 0
        %1226 = vmatprep.subr.bf16.mxu0 0
        %1227 = vmatpush1.bf16.msra.mxu0 0
        %1228 = vmatprep.subr.bf16.mxu0 0
        %1229 = vmatpush1.bf16.msra.mxu0 0
        %1230 = vmatprep.subr.bf16.mxu0 0
        %1231 = vmatpush1.bf16.msra.mxu0 0
        %1232 = vmatprep.subr.bf16.mxu0 0
        %1233 = vmatpush1.bf16.msra.mxu0 0
        %1234 = vmatprep.subr.bf16.mxu0 0
        %1235 = vmatpush1.bf16.msra.mxu0 0
        %1236 = vmatprep.subr.bf16.mxu0 0
        %1237 = vmatpush1.bf16.msra.mxu0 0
        %1238 = vmatprep.subr.bf16.mxu0 0
        %1239 = vmatpush1.bf16.msra.mxu0 0
        %1240 = vmatprep.subr.bf16.mxu0 0
        %1241 = vmatpush1.bf16.msra.mxu0 0
        %1242 = vmatprep.subr.bf16.mxu0 0
        %1243 = vmatpush1.bf16.msra.mxu0 0
        %1244 = vmatprep.subr.bf16.mxu0 0
        %1245 = vmatpush1.bf16.msra.mxu0 0
        %1246 = vmatprep.mubr.bf16.mxu0 0
        %1247 = vmatmul.mubr.bf16.gmra.mrb[0].mxu0 %v1200
        %v1248 = vpop.f32.mrb[0].mxu0
        %v1249 = vadd.f32 0.0, %v1248
        %v1250 = vpop.f32.mrb[0].mxu0
        %v1251 = vpop.f32.mrb[0].mxu0
        %v1252 = vadd.f32 0.0, %v1251
        %v1253 = vpop.f32.mrb[0].mxu0
        %1254 = vmatprep.mubr.bf16.mxu0 0
        %1255 = vmatmul.mubr.bf16.gmra.mrb[0].mxu0 %v1203
        %v1256 = vpop.f32.mrb[0].mxu0
        %v1257 = vadd.f32 0.0, %v1256
        %v1258 = vpop.f32.mrb[0].mxu0
        %v1259 = vpop.f32.mrb[0].mxu0
        %v1260 = vadd.f32 0.0, %v1259
        %v1261 = vpop.f32.mrb[0].mxu0
        %1262 = vmatprep.mubr.bf16.mxu0 0
        %1263 = vmatmul.mubr.bf16.gmra.mrb[0].mxu0 %v1206
        %v1264 = vpop.f32.mrb[0].mxu0
        %v1265 = vadd.f32 0.0, %v1264
        %v1266 = vpop.f32.mrb[0].mxu0
        %v1267 = vpop.f32.mrb[0].mxu0
        %v1268 = vadd.f32 0.0, %v1267
        %v1269 = vpop.f32.mrb[0].mxu0
        %1270 = vmatprep.mubr.bf16.mxu0 0
        %1271 = vmatmul.mubr.bf16.gmra.mrb[0].mxu0 %v1209
        %v1272 = vpop.f32.mrb[0].mxu0
        %v1273 = vadd.f32 0.0, %v1272
        %v1274 = vpop.f32.mrb[0].mxu0
        %v1275 = vpop.f32.mrb[0].mxu0
        %v1276 = vadd.f32 0.0, %v1275
        %v1277 = vpop.f32.mrb[0].mxu0
        %1278 = vmatprep.mubr.bf16.mxu0 0
        %1279 = vmatmul.mubr.bf16.gmra.mrb[0].mxu0 %v1212
        %v1280 = vpop.f32.mrb[0].mxu0
        %v1281 = vadd.f32 0.0, %v1280
        %v1282 = vpop.f32.mrb[0].mxu0
        %v1283 = vpop.f32.mrb[0].mxu0
        %v1284 = vadd.f32 0.0, %v1283
        %v1285 = vpop.f32.mrb[0].mxu0
        %1286 = vdwg.mxu0
        %s1287 = scalar_select %p236, 1, 0
        %v1288 = vstv %s1287
        %vm1289 = vcmp.eq.s32.totalorder %v1288, 1
        %v1290 = vlaneseq
        %v1291 = vshrl.u32 %v1290, 7
        %vm1292 = vcmp.eq.s32.totalorder %v1291, 0
        %vm1293 = vcmp.eq.s32.totalorder %v1291, 7
        %v1294 = vsel %vm1289, 1, 0
        %vm1295 = vcmp.eq.s32.totalorder %v1294, 1
        %v1296 = vsel %vm1295, %v1116, %v1113
        %v1297 = vsel 0, %v1121, %v1116
        %v1298 = vsel 0, %v1124, %v1121
        %v1299 = vsel 0, %v1129, %v1124
        %v1300 = vsel 0, %v1132, %v1129
        %v1301 = vsel 0, %v1137, %v1132
        %v1302 = vsel 0, %v1140, %v1137
        %v1303 = vsel 0, %v1145, %v1140
        %v1304 = vsel 0, %v606, %v611
        %v1305 = vsel 0, %v611, %v614
        %v1306 = vsel 0, %v614, %v619
        %v1307 = vsel 0, %v619, %v622
        %v1308 = vsel 0, %v622, %v627
        %v1309 = vsel 0, %v627, %v630
        %v1310 = vsel 0, %v630, %v635
        %v1311 = vsel %vm1295, %v635, %v638
        %v1312 = vsel 0, %v1113, %v1121
        %v1313 = vsel 0, %v1116, %v1124
        %v1314 = vsel 0, %v1121, %v1129
        %v1315 = vsel 0, %v1124, %v1132
        %v1316 = vsel 0, %v1129, %v1137
        %v1317 = vsel 0, %v1132, %v1140
        %v1318 = vsel 0, %v1137, %v1145
        %v1319 = vsel %vm1295, %v1140, %v1148
        %v1320 = vadd.f32 %v1296, %v1304
        %v1321 = vadd.f32 %v1297, %v1305
        %v1322 = vadd.f32 %v1298, %v1306
        %v1323 = vadd.f32 %v1299, %v1307
        %v1324 = vadd.f32 %v1300, %v1308
        %v1325 = vadd.f32 %v1301, %v1309
        %v1326 = vadd.f32 %v1302, %v1310
        %v1327 = vadd.f32 %v1303, %v1311
        %v1328 = vadd.f32 %v606, %v1116
        %v1329 = vadd.f32 %v611, %v1121
        %v1330 = vadd.f32 %v614, %v1124
        %v1331 = vadd.f32 %v619, %v1129
        %v1332 = vadd.f32 %v622, %v1132
        %v1333 = vadd.f32 %v627, %v1137
        %v1334 = vadd.f32 %v630, %v1140
        %v1335 = vadd.f32 %v635, %v1145
        %v1336 = vmul.f32 %v1328, 3.0
        %v1337 = vmul.f32 %v1329, 3.0
        %v1338 = vmul.f32 %v1330, 3.0
        %v1339 = vmul.f32 %v1331, 3.0
        %v1340 = vmul.f32 %v1332, 3.0
        %v1341 = vmul.f32 %v1333, 3.0
        %v1342 = vmul.f32 %v1334, 3.0
        %v1343 = vmul.f32 %v1335, 3.0
        %v1344 = vadd.f32 %v1320, %v1336
        %v1345 = vadd.f32 %v1321, %v1337
        %v1346 = vadd.f32 %v1322, %v1338
        %v1347 = vadd.f32 %v1323, %v1339
        %v1348 = vadd.f32 %v1324, %v1340
        %v1349 = vadd.f32 %v1325, %v1341
        %v1350 = vadd.f32 %v1326, %v1342
        %v1351 = vadd.f32 %v1327, %v1343
        %v1352 = vadd.f32 %v606, %v1312
        %v1353 = vadd.f32 %v611, %v1313
        %v1354 = vadd.f32 %v614, %v1314
        %v1355 = vadd.f32 %v619, %v1315
        %v1356 = vadd.f32 %v622, %v1316
        %v1357 = vadd.f32 %v627, %v1317
        %v1358 = vadd.f32 %v630, %v1318
        %v1359 = vadd.f32 %v635, %v1319
        %v1360 = vadd.f32 %v1116, %v1304
        %v1361 = vadd.f32 %v1121, %v1305
        %v1362 = vadd.f32 %v1124, %v1306
        %v1363 = vadd.f32 %v1129, %v1307
        %v1364 = vadd.f32 %v1132, %v1308
        %v1365 = vadd.f32 %v1137, %v1309
        %v1366 = vadd.f32 %v1140, %v1310
        %v1367 = vadd.f32 %v1145, %v1311
        %v1368 = vmul.f32 %v1360, 3.0
        %v1369 = vmul.f32 %v1361, 3.0
        %v1370 = vmul.f32 %v1362, 3.0
        %v1371 = vmul.f32 %v1363, 3.0
        %v1372 = vmul.f32 %v1364, 3.0
        %v1373 = vmul.f32 %v1365, 3.0
        %v1374 = vmul.f32 %v1366, 3.0
        %v1375 = vmul.f32 %v1367, 3.0
        %v1376 = vadd.f32 %v1352, %v1368
        %v1377 = vadd.f32 %v1353, %v1369
        %v1378 = vadd.f32 %v1354, %v1370
        %v1379 = vadd.f32 %v1355, %v1371
        %v1380 = vadd.f32 %v1356, %v1372
        %v1381 = vadd.f32 %v1357, %v1373
        %v1382 = vadd.f32 %v1358, %v1374
        %v1383 = vadd.f32 %v1359, %v1375
        %v1384 = vsel %vm1295, %v1252, %v1249
        %v1385 = vsel 0, %v1257, %v1252
        %v1386 = vsel 0, %v1260, %v1257
        %v1387 = vsel 0, %v1265, %v1260
        %v1388 = vsel 0, %v1268, %v1265
        %v1389 = vsel 0, %v1273, %v1268
        %v1390 = vsel 0, %v1276, %v1273
        %v1391 = vsel 0, %v1281, %v1276
        %v1392 = vsel 0, %v978, %v983
        %v1393 = vsel 0, %v983, %v986
        %v1394 = vsel 0, %v986, %v991
        %v1395 = vsel 0, %v991, %v994
        %v1396 = vsel 0, %v994, %v999
        %v1397 = vsel 0, %v999, %v1002
        %v1398 = vsel 0, %v1002, %v1007
        %v1399 = vsel %vm1295, %v1007, %v1010
        %v1400 = vsel 0, %v1249, %v1257
        %v1401 = vsel 0, %v1252, %v1260
        %v1402 = vsel 0, %v1257, %v1265
        %v1403 = vsel 0, %v1260, %v1268
        %v1404 = vsel 0, %v1265, %v1273
        %v1405 = vsel 0, %v1268, %v1276
        %v1406 = vsel 0, %v1273, %v1281
        %v1407 = vsel %vm1295, %v1276, %v1284
        %v1408 = vadd.f32 %v1384, %v1392
        %v1409 = vadd.f32 %v1385, %v1393
        %v1410 = vadd.f32 %v1386, %v1394
        %v1411 = vadd.f32 %v1387, %v1395
        %v1412 = vadd.f32 %v1388, %v1396
        %v1413 = vadd.f32 %v1389, %v1397
        %v1414 = vadd.f32 %v1390, %v1398
        %v1415 = vadd.f32 %v1391, %v1399
        %v1416 = vadd.f32 %v978, %v1252
        %v1417 = vadd.f32 %v983, %v1257
        %v1418 = vadd.f32 %v986, %v1260
        %v1419 = vadd.f32 %v991, %v1265
        %v1420 = vadd.f32 %v994, %v1268
        %v1421 = vadd.f32 %v999, %v1273
        %v1422 = vadd.f32 %v1002, %v1276
        %v1423 = vadd.f32 %v1007, %v1281
        %v1424 = vmul.f32 %v1416, 3.0
        %v1425 = vmul.f32 %v1417, 3.0
        %v1426 = vmul.f32 %v1418, 3.0
        %v1427 = vmul.f32 %v1419, 3.0
        %v1428 = vmul.f32 %v1420, 3.0
        %v1429 = vmul.f32 %v1421, 3.0
        %v1430 = vmul.f32 %v1422, 3.0
        %v1431 = vmul.f32 %v1423, 3.0
        %v1432 = vadd.f32 %v1408, %v1424
        %v1433 = vadd.f32 %v1409, %v1425
        %v1434 = vadd.f32 %v1410, %v1426
        %v1435 = vadd.f32 %v1411, %v1427
        %v1436 = vadd.f32 %v1412, %v1428
        %v1437 = vadd.f32 %v1413, %v1429
        %v1438 = vadd.f32 %v1414, %v1430
        %v1439 = vadd.f32 %v1415, %v1431
        %v1440 = vadd.f32 %v978, %v1400
        %v1441 = vadd.f32 %v983, %v1401
        %v1442 = vadd.f32 %v986, %v1402
        %v1443 = vadd.f32 %v991, %v1403
        %v1444 = vadd.f32 %v994, %v1404
        %v1445 = vadd.f32 %v999, %v1405
        %v1446 = vadd.f32 %v1002, %v1406
        %v1447 = vadd.f32 %v1007, %v1407
        %v1448 = vadd.f32 %v1252, %v1392
        %v1449 = vadd.f32 %v1257, %v1393
        %v1450 = vadd.f32 %v1260, %v1394
        %v1451 = vadd.f32 %v1265, %v1395
        %v1452 = vadd.f32 %v1268, %v1396
        %v1453 = vadd.f32 %v1273, %v1397
        %v1454 = vadd.f32 %v1276, %v1398
        %v1455 = vadd.f32 %v1281, %v1399
        %v1456 = vmul.f32 %v1448, 3.0
        %v1457 = vmul.f32 %v1449, 3.0
        %v1458 = vmul.f32 %v1450, 3.0
        %v1459 = vmul.f32 %v1451, 3.0
        %v1460 = vmul.f32 %v1452, 3.0
        %v1461 = vmul.f32 %v1453, 3.0
        %v1462 = vmul.f32 %v1454, 3.0
        %v1463 = vmul.f32 %v1455, 3.0
        %v1464 = vadd.f32 %v1440, %v1456
        %v1465 = vadd.f32 %v1441, %v1457
        %v1466 = vadd.f32 %v1442, %v1458
        %v1467 = vadd.f32 %v1443, %v1459
        %v1468 = vadd.f32 %v1444, %v1460
        %v1469 = vadd.f32 %v1445, %v1461
        %v1470 = vadd.f32 %v1446, %v1462
        %v1471 = vadd.f32 %v1447, %v1463
        %v1472 = vrot.slane %v1432, 7
        %v1473 = vrot.slane %v1433, 7
        %v1474 = vrot.slane %v1434, 7
        %v1475 = vrot.slane %v1435, 7
        %v1476 = vrot.slane %v1436, 7
        %v1477 = vrot.slane %v1437, 7
        %v1478 = vrot.slane %v1438, 7
        %v1479 = vrot.slane %v1439, 7
        %v1480 = vsel %vm1292, 1, 0
        %vm1481 = vcmp.eq.s32.totalorder %v1480, 1
        %v1482 = vsel %vm1481, %v1432, %v1472
        %v1483 = vsel %vm1481, %v1433, %v1473
        %v1484 = vsel %vm1481, %v1434, %v1474
        %v1485 = vsel %vm1481, %v1435, %v1475
        %v1486 = vsel %vm1481, %v1436, %v1476
        %v1487 = vsel %vm1481, %v1437, %v1477
        %v1488 = vsel %vm1481, %v1438, %v1478
        %v1489 = vsel %vm1481, %v1439, %v1479
        %v1490 = vrot.slane %v1344, 1
        %v1491 = vrot.slane %v1345, 1
        %v1492 = vrot.slane %v1346, 1
        %v1493 = vrot.slane %v1347, 1
        %v1494 = vrot.slane %v1348, 1
        %v1495 = vrot.slane %v1349, 1
        %v1496 = vrot.slane %v1350, 1
        %v1497 = vrot.slane %v1351, 1
        %v1498 = vsel %vm1293, 1, 0
        %vm1499 = vcmp.eq.s32.totalorder %v1498, 1
        %v1500 = vsel %vm1499, %v1344, %v1490
        %v1501 = vsel %vm1499, %v1345, %v1491
        %v1502 = vsel %vm1499, %v1346, %v1492
        %v1503 = vsel %vm1499, %v1347, %v1493
        %v1504 = vsel %vm1499, %v1348, %v1494
        %v1505 = vsel %vm1499, %v1349, %v1495
        %v1506 = vsel %vm1499, %v1350, %v1496
        %v1507 = vsel %vm1499, %v1351, %v1497
        %v1508 = vrot.slane %v1432, 1
        %v1509 = vrot.slane %v1433, 1
        %v1510 = vrot.slane %v1434, 1
        %v1511 = vrot.slane %v1435, 1
        %v1512 = vrot.slane %v1436, 1
        %v1513 = vrot.slane %v1437, 1
        %v1514 = vrot.slane %v1438, 1
        %v1515 = vrot.slane %v1439, 1
        %v1516 = vlaneseq
        %v1517 = vshrl.u32 %v1516, 7
        %v1518 = vsub.s32 6, %v1517
        %v1519 = vrot.slane %v1432, %v1518
        %v1520 = vlaneseq
        %v1521 = vshrl.u32 %v1520, 7
        %v1522 = vsub.s32 6, %v1521
        %v1523 = vrot.slane %v1433, %v1522
        %v1524 = vlaneseq
        %v1525 = vshrl.u32 %v1524, 7
        %v1526 = vsub.s32 6, %v1525
        %v1527 = vrot.slane %v1434, %v1526
        %v1528 = vlaneseq
        %v1529 = vshrl.u32 %v1528, 7
        %v1530 = vsub.s32 6, %v1529
        %v1531 = vrot.slane %v1435, %v1530
        %v1532 = vlaneseq
        %v1533 = vshrl.u32 %v1532, 7
        %v1534 = vsub.s32 6, %v1533
        %v1535 = vrot.slane %v1436, %v1534
        %v1536 = vlaneseq
        %v1537 = vshrl.u32 %v1536, 7
        %v1538 = vsub.s32 6, %v1537
        %v1539 = vrot.slane %v1437, %v1538
        %v1540 = vlaneseq
        %v1541 = vshrl.u32 %v1540, 7
        %v1542 = vsub.s32 6, %v1541
        %v1543 = vrot.slane %v1438, %v1542
        %v1544 = vlaneseq
        %v1545 = vshrl.u32 %v1544, 7
        %v1546 = vsub.s32 6, %v1545
        %v1547 = vrot.slane %v1439, %v1546
        %v1548 = vsel %vm1499, %v1519, %v1508
        %v1549 = vsel %vm1499, %v1523, %v1509
        %v1550 = vsel %vm1499, %v1527, %v1510
        %v1551 = vsel %vm1499, %v1531, %v1511
        %v1552 = vsel %vm1499, %v1535, %v1512
        %v1553 = vsel %vm1499, %v1539, %v1513
        %v1554 = vsel %vm1499, %v1543, %v1514
        %v1555 = vsel %vm1499, %v1547, %v1515
        %v1556 = vadd.f32 %v1482, %v1500
        %v1557 = vadd.f32 %v1483, %v1501
        %v1558 = vadd.f32 %v1484, %v1502
        %v1559 = vadd.f32 %v1485, %v1503
        %v1560 = vadd.f32 %v1486, %v1504
        %v1561 = vadd.f32 %v1487, %v1505
        %v1562 = vadd.f32 %v1488, %v1506
        %v1563 = vadd.f32 %v1489, %v1507
        %v1564 = vadd.f32 %v1344, %v1432
        %v1565 = vadd.f32 %v1345, %v1433
        %v1566 = vadd.f32 %v1346, %v1434
        %v1567 = vadd.f32 %v1347, %v1435
        %v1568 = vadd.f32 %v1348, %v1436
        %v1569 = vadd.f32 %v1349, %v1437
        %v1570 = vadd.f32 %v1350, %v1438
        %v1571 = vadd.f32 %v1351, %v1439
        %v1572 = vmul.f32 %v1564, 3.0
        %v1573 = vmul.f32 %v1565, 3.0
        %v1574 = vmul.f32 %v1566, 3.0
        %v1575 = vmul.f32 %v1567, 3.0
        %v1576 = vmul.f32 %v1568, 3.0
        %v1577 = vmul.f32 %v1569, 3.0
        %v1578 = vmul.f32 %v1570, 3.0
        %v1579 = vmul.f32 %v1571, 3.0
        %v1580 = vadd.f32 %v1556, %v1572
        %v1581 = vadd.f32 %v1557, %v1573
        %v1582 = vadd.f32 %v1558, %v1574
        %v1583 = vadd.f32 %v1559, %v1575
        %v1584 = vadd.f32 %v1560, %v1576
        %v1585 = vadd.f32 %v1561, %v1577
        %v1586 = vadd.f32 %v1562, %v1578
        %v1587 = vadd.f32 %v1563, %v1579
        %v1588 = vadd.f32 %v1344, %v1548
        %v1589 = vadd.f32 %v1345, %v1549
        %v1590 = vadd.f32 %v1346, %v1550
        %v1591 = vadd.f32 %v1347, %v1551
        %v1592 = vadd.f32 %v1348, %v1552
        %v1593 = vadd.f32 %v1349, %v1553
        %v1594 = vadd.f32 %v1350, %v1554
        %v1595 = vadd.f32 %v1351, %v1555
        %v1596 = vadd.f32 %v1432, %v1500
        %v1597 = vadd.f32 %v1433, %v1501
        %v1598 = vadd.f32 %v1434, %v1502
        %v1599 = vadd.f32 %v1435, %v1503
        %v1600 = vadd.f32 %v1436, %v1504
        %v1601 = vadd.f32 %v1437, %v1505
        %v1602 = vadd.f32 %v1438, %v1506
        %v1603 = vadd.f32 %v1439, %v1507
        %v1604 = vmul.f32 %v1596, 3.0
        %v1605 = vmul.f32 %v1597, 3.0
        %v1606 = vmul.f32 %v1598, 3.0
        %v1607 = vmul.f32 %v1599, 3.0
        %v1608 = vmul.f32 %v1600, 3.0
        %v1609 = vmul.f32 %v1601, 3.0
        %v1610 = vmul.f32 %v1602, 3.0
        %v1611 = vmul.f32 %v1603, 3.0
        %v1612 = vadd.f32 %v1588, %v1604
        %v1613 = vadd.f32 %v1589, %v1605
        %v1614 = vadd.f32 %v1590, %v1606
        %v1615 = vadd.f32 %v1591, %v1607
        %v1616 = vadd.f32 %v1592, %v1608
        %v1617 = vadd.f32 %v1593, %v1609
        %v1618 = vadd.f32 %v1594, %v1610
        %v1619 = vadd.f32 %v1595, %v1611
        %1628 = vrot.lane.b32.xlu0 %v1612, 4
        %v1629 = vpop.permute.xlu0 %1628
        %1630 = vrot.lane.b32.xlu0 %v1613, 4
        %v1631 = vpop.permute.xlu0 %1630
        %1632 = vrot.lane.b32.xlu0 %v1614, 4
        %v1633 = vpop.permute.xlu0 %1632
        %1634 = vrot.lane.b32.xlu0 %v1615, 4
        %v1635 = vpop.permute.xlu0 %1634
        %1636 = vrot.lane.b32.xlu0 %v1616, 4
        %v1637 = vpop.permute.xlu0 %1636
        %1638 = vrot.lane.b32.xlu0 %v1617, 4
        %v1639 = vpop.permute.xlu0 %1638
        %1640 = vrot.lane.b32.xlu0 %v1618, 4
        %v1641 = vpop.permute.xlu0 %1640
        %1642 = vrot.lane.b32.xlu0 %v1619, 4
        %v1643 = vpop.permute.xlu0 %1642
        %vm1652 = vcmask 31744
        %v1653 = vsel %vm1652, %v1580, %v1629
        %v1654 = vsel %vm1652, %v1581, %v1631
        %v1655 = vsel %vm1652, %v1582, %v1633
        %v1656 = vsel %vm1652, %v1583, %v1635
        %v1657 = vsel %vm1652, %v1584, %v1637
        %v1658 = vsel %vm1652, %v1585, %v1639
        %v1659 = vsel %vm1652, %v1586, %v1641
        %v1660 = vsel %vm1652, %v1587, %v1643
        %1661 = vst.msk [vmem:[%s193] sm:$0xff] %vm439, %v1653
        %1662 = vst.msk [vmem:[%s193 + $0x10] sm:$0xff] %vm439, %v1654
        %1663 = vst.msk [vmem:[%s193 + $0x20] sm:$0xff] %vm439, %v1655
        %1664 = vst.msk [vmem:[%s193 + $0x30] sm:$0xff] %vm439, %v1656
        %1665 = vst.msk [vmem:[%s193 + $0x40] sm:$0xff] %vm439, %v1657
        %1666 = vst.msk [vmem:[%s193 + $0x50] sm:$0xff] %vm439, %v1658
        %1667 = vst.msk [vmem:[%s193 + $0x60] sm:$0xff] %vm439, %v1659
        %1668 = vst.msk [vmem:[%s193 + $0x70] sm:$0xff] %vm439, %v1660
        %v1669 = vsel %vm439, %v1653, 0.0
        %v1670 = vsel %vm439, %v1654, 0.0
        %v1671 = vadd.f32 %v1669, %v1670
        %v1672 = vsel %vm439, %v1655, 0.0
        %v1673 = vadd.f32 %v1671, %v1672
        %v1674 = vsel %vm439, %v1656, 0.0
        %v1675 = vadd.f32 %v1673, %v1674
        %v1676 = vsel %vm439, %v1657, 0.0
        %v1677 = vadd.f32 %v1675, %v1676
        %v1678 = vsel %vm439, %v1658, 0.0
        %v1679 = vadd.f32 %v1677, %v1678
        %v1680 = vsel %vm439, %v1659, 0.0
        %v1681 = vadd.f32 %v1679, %v1680
        %v1682 = vsel %vm439, %v1660, 0.0
        %v1683 = vadd.f32 %v1681, %v1682
        %v1684 = vrot.slane %v1683, 4
        %v1685 = vadd.f32 %v1683, %v1684
        %v1686 = vrot.slane %v1685, 2
        %v1687 = vadd.f32 %v1685, %v1686
        %v1688 = vrot.slane %v1687, 1
        %v1689 = vadd.f32 %v1687, %v1688
        %v1690 = vmul.f32 %v1653, %v1653
        %v1691 = vmul.f32 %v1654, %v1654
        %v1692 = vmul.f32 %v1655, %v1655
        %v1693 = vmul.f32 %v1656, %v1656
        %v1694 = vmul.f32 %v1657, %v1657
        %v1695 = vmul.f32 %v1658, %v1658
        %v1696 = vmul.f32 %v1659, %v1659
        %v1697 = vmul.f32 %v1660, %v1660
        %v1698 = vsel %vm439, %v1690, 0.0
        %v1699 = vsel %vm439, %v1691, 0.0
        %v1700 = vadd.f32 %v1698, %v1699
        %v1701 = vsel %vm439, %v1692, 0.0
        %v1702 = vadd.f32 %v1700, %v1701
        %v1703 = vsel %vm439, %v1693, 0.0
        %v1704 = vadd.f32 %v1702, %v1703
        %v1705 = vsel %vm439, %v1694, 0.0
        %v1706 = vadd.f32 %v1704, %v1705
        %v1707 = vsel %vm439, %v1695, 0.0
        %v1708 = vadd.f32 %v1706, %v1707
        %v1709 = vsel %vm439, %v1696, 0.0
        %v1710 = vadd.f32 %v1708, %v1709
        %v1711 = vsel %vm439, %v1697, 0.0
        %v1712 = vadd.f32 %v1710, %v1711
        %v1713 = vrot.slane %v1712, 4
        %v1714 = vadd.f32 %v1712, %v1713
        %v1715 = vrot.slane %v1714, 2
        %v1716 = vadd.f32 %v1714, %v1715
        %v1717 = vrot.slane %v1716, 1
        %v1718 = vadd.f32 %v1716, %v1717
        %v1719 = vrot.slane %v1464, 7
        %v1720 = vrot.slane %v1465, 7
        %v1721 = vrot.slane %v1466, 7
        %v1722 = vrot.slane %v1467, 7
        %v1723 = vrot.slane %v1468, 7
        %v1724 = vrot.slane %v1469, 7
        %v1725 = vrot.slane %v1470, 7
        %v1726 = vrot.slane %v1471, 7
        %v1727 = vsel %vm1481, %v1464, %v1719
        %v1728 = vsel %vm1481, %v1465, %v1720
        %v1729 = vsel %vm1481, %v1466, %v1721
        %v1730 = vsel %vm1481, %v1467, %v1722
        %v1731 = vsel %vm1481, %v1468, %v1723
        %v1732 = vsel %vm1481, %v1469, %v1724
        %v1733 = vsel %vm1481, %v1470, %v1725
        %v1734 = vsel %vm1481, %v1471, %v1726
        %v1735 = vrot.slane %v1376, 1
        %v1736 = vrot.slane %v1377, 1
        %v1737 = vrot.slane %v1378, 1
        %v1738 = vrot.slane %v1379, 1
        %v1739 = vrot.slane %v1380, 1
        %v1740 = vrot.slane %v1381, 1
        %v1741 = vrot.slane %v1382, 1
        %v1742 = vrot.slane %v1383, 1
        %v1743 = vsel %vm1499, %v1376, %v1735
        %v1744 = vsel %vm1499, %v1377, %v1736
        %v1745 = vsel %vm1499, %v1378, %v1737
        %v1746 = vsel %vm1499, %v1379, %v1738
        %v1747 = vsel %vm1499, %v1380, %v1739
        %v1748 = vsel %vm1499, %v1381, %v1740
        %v1749 = vsel %vm1499, %v1382, %v1741
        %v1750 = vsel %vm1499, %v1383, %v1742
        %v1751 = vrot.slane %v1464, 1
        %v1752 = vrot.slane %v1465, 1
        %v1753 = vrot.slane %v1466, 1
        %v1754 = vrot.slane %v1467, 1
        %v1755 = vrot.slane %v1468, 1
        %v1756 = vrot.slane %v1469, 1
        %v1757 = vrot.slane %v1470, 1
        %v1758 = vrot.slane %v1471, 1
        %v1759 = vlaneseq
        %v1760 = vshrl.u32 %v1759, 7
        %v1761 = vsub.s32 6, %v1760
        %v1762 = vrot.slane %v1464, %v1761
        %v1763 = vlaneseq
        %v1764 = vshrl.u32 %v1763, 7
        %v1765 = vsub.s32 6, %v1764
        %v1766 = vrot.slane %v1465, %v1765
        %v1767 = vlaneseq
        %v1768 = vshrl.u32 %v1767, 7
        %v1769 = vsub.s32 6, %v1768
        %v1770 = vrot.slane %v1466, %v1769
        %v1771 = vlaneseq
        %v1772 = vshrl.u32 %v1771, 7
        %v1773 = vsub.s32 6, %v1772
        %v1774 = vrot.slane %v1467, %v1773
        %v1775 = vlaneseq
        %v1776 = vshrl.u32 %v1775, 7
        %v1777 = vsub.s32 6, %v1776
        %v1778 = vrot.slane %v1468, %v1777
        %v1779 = vlaneseq
        %v1780 = vshrl.u32 %v1779, 7
        %v1781 = vsub.s32 6, %v1780
        %v1782 = vrot.slane %v1469, %v1781
        %v1783 = vlaneseq
        %v1784 = vshrl.u32 %v1783, 7
        %v1785 = vsub.s32 6, %v1784
        %v1786 = vrot.slane %v1470, %v1785
        %v1787 = vlaneseq
        %v1788 = vshrl.u32 %v1787, 7
        %v1789 = vsub.s32 6, %v1788
        %v1790 = vrot.slane %v1471, %v1789
        %v1791 = vsel %vm1499, %v1762, %v1751
        %v1792 = vsel %vm1499, %v1766, %v1752
        %v1793 = vsel %vm1499, %v1770, %v1753
        %v1794 = vsel %vm1499, %v1774, %v1754
        %v1795 = vsel %vm1499, %v1778, %v1755
        %v1796 = vsel %vm1499, %v1782, %v1756
        %v1797 = vsel %vm1499, %v1786, %v1757
        %v1798 = vsel %vm1499, %v1790, %v1758
        %v1799 = vadd.f32 %v1727, %v1743
        %v1800 = vadd.f32 %v1728, %v1744
        %v1801 = vadd.f32 %v1729, %v1745
        %v1802 = vadd.f32 %v1730, %v1746
        %v1803 = vadd.f32 %v1731, %v1747
        %v1804 = vadd.f32 %v1732, %v1748
        %v1805 = vadd.f32 %v1733, %v1749
        %v1806 = vadd.f32 %v1734, %v1750
        %v1807 = vadd.f32 %v1376, %v1464
        %v1808 = vadd.f32 %v1377, %v1465
        %v1809 = vadd.f32 %v1378, %v1466
        %v1810 = vadd.f32 %v1379, %v1467
        %v1811 = vadd.f32 %v1380, %v1468
        %v1812 = vadd.f32 %v1381, %v1469
        %v1813 = vadd.f32 %v1382, %v1470
        %v1814 = vadd.f32 %v1383, %v1471
        %v1815 = vmul.f32 %v1807, 3.0
        %v1816 = vmul.f32 %v1808, 3.0
        %v1817 = vmul.f32 %v1809, 3.0
        %v1818 = vmul.f32 %v1810, 3.0
        %v1819 = vmul.f32 %v1811, 3.0
        %v1820 = vmul.f32 %v1812, 3.0
        %v1821 = vmul.f32 %v1813, 3.0
        %v1822 = vmul.f32 %v1814, 3.0
        %v1823 = vadd.f32 %v1799, %v1815
        %v1824 = vadd.f32 %v1800, %v1816
        %v1825 = vadd.f32 %v1801, %v1817
        %v1826 = vadd.f32 %v1802, %v1818
        %v1827 = vadd.f32 %v1803, %v1819
        %v1828 = vadd.f32 %v1804, %v1820
        %v1829 = vadd.f32 %v1805, %v1821
        %v1830 = vadd.f32 %v1806, %v1822
        %v1831 = vadd.f32 %v1376, %v1791
        %v1832 = vadd.f32 %v1377, %v1792
        %v1833 = vadd.f32 %v1378, %v1793
        %v1834 = vadd.f32 %v1379, %v1794
        %v1835 = vadd.f32 %v1380, %v1795
        %v1836 = vadd.f32 %v1381, %v1796
        %v1837 = vadd.f32 %v1382, %v1797
        %v1838 = vadd.f32 %v1383, %v1798
        %v1839 = vadd.f32 %v1464, %v1743
        %v1840 = vadd.f32 %v1465, %v1744
        %v1841 = vadd.f32 %v1466, %v1745
        %v1842 = vadd.f32 %v1467, %v1746
        %v1843 = vadd.f32 %v1468, %v1747
        %v1844 = vadd.f32 %v1469, %v1748
        %v1845 = vadd.f32 %v1470, %v1749
        %v1846 = vadd.f32 %v1471, %v1750
        %v1847 = vmul.f32 %v1839, 3.0
        %v1848 = vmul.f32 %v1840, 3.0
        %v1849 = vmul.f32 %v1841, 3.0
        %v1850 = vmul.f32 %v1842, 3.0
        %v1851 = vmul.f32 %v1843, 3.0
        %v1852 = vmul.f32 %v1844, 3.0
        %v1853 = vmul.f32 %v1845, 3.0
        %v1854 = vmul.f32 %v1846, 3.0
        %v1855 = vadd.f32 %v1831, %v1847
        %v1856 = vadd.f32 %v1832, %v1848
        %v1857 = vadd.f32 %v1833, %v1849
        %v1858 = vadd.f32 %v1834, %v1850
        %v1859 = vadd.f32 %v1835, %v1851
        %v1860 = vadd.f32 %v1836, %v1852
        %v1861 = vadd.f32 %v1837, %v1853
        %v1862 = vadd.f32 %v1838, %v1854
        %1871 = vrot.lane.b32.xlu0 %v1855, 4
        %v1872 = vpop.permute.xlu0 %1871
        %1873 = vrot.lane.b32.xlu0 %v1856, 4
        %v1874 = vpop.permute.xlu0 %1873
        %1875 = vrot.lane.b32.xlu0 %v1857, 4
        %v1876 = vpop.permute.xlu0 %1875
        %1877 = vrot.lane.b32.xlu0 %v1858, 4
        %v1878 = vpop.permute.xlu0 %1877
        %1879 = vrot.lane.b32.xlu0 %v1859, 4
        %v1880 = vpop.permute.xlu0 %1879
        %1881 = vrot.lane.b32.xlu0 %v1860, 4
        %v1882 = vpop.permute.xlu0 %1881
        %1883 = vrot.lane.b32.xlu0 %v1861, 4
        %v1884 = vpop.permute.xlu0 %1883
        %1885 = vrot.lane.b32.xlu0 %v1862, 4
        %v1886 = vpop.permute.xlu0 %1885
        %v1895 = vsel %vm1652, %v1823, %v1872
        %v1896 = vsel %vm1652, %v1824, %v1874
        %v1897 = vsel %vm1652, %v1825, %v1876
        %v1898 = vsel %vm1652, %v1826, %v1878
        %v1899 = vsel %vm1652, %v1827, %v1880
        %v1900 = vsel %vm1652, %v1828, %v1882
        %v1901 = vsel %vm1652, %v1829, %v1884
        %v1902 = vsel %vm1652, %v1830, %v1886
        %s1903 = scalar_lea.vmem %s193, 8 [#allocation2]
        %1904 = vst.msk [vmem:[%s1903] sm:$0xff] %vm439, %v1895
        %1905 = vst.msk [vmem:[%s1903 + $0x10] sm:$0xff] %vm439, %v1896
        %1906 = vst.msk [vmem:[%s1903 + $0x20] sm:$0xff] %vm439, %v1897
        %1907 = vst.msk [vmem:[%s1903 + $0x30] sm:$0xff] %vm439, %v1898
        %1908 = vst.msk [vmem:[%s1903 + $0x40] sm:$0xff] %vm439, %v1899
        %1909 = vst.msk [vmem:[%s1903 + $0x50] sm:$0xff] %vm439, %v1900
        %1910 = vst.msk [vmem:[%s1903 + $0x60] sm:$0xff] %vm439, %v1901
        %1911 = vst.msk [vmem:[%s1903 + $0x70] sm:$0xff] %vm439, %v1902
        %v1912 = vsel %vm439, %v1895, 0.0
        %v1913 = vsel %vm439, %v1896, 0.0
        %v1914 = vadd.f32 %v1912, %v1913
        %v1915 = vsel %vm439, %v1897, 0.0
        %v1916 = vadd.f32 %v1914, %v1915
        %v1917 = vsel %vm439, %v1898, 0.0
        %v1918 = vadd.f32 %v1916, %v1917
        %v1919 = vsel %vm439, %v1899, 0.0
        %v1920 = vadd.f32 %v1918, %v1919
        %v1921 = vsel %vm439, %v1900, 0.0
        %v1922 = vadd.f32 %v1920, %v1921
        %v1923 = vsel %vm439, %v1901, 0.0
        %v1924 = vadd.f32 %v1922, %v1923
        %v1925 = vsel %vm439, %v1902, 0.0
        %v1926 = vadd.f32 %v1924, %v1925
        %v1927 = vrot.slane %v1926, 4
        %v1928 = vadd.f32 %v1926, %v1927
        %v1929 = vrot.slane %v1928, 2
        %v1930 = vadd.f32 %v1928, %v1929
        %v1931 = vrot.slane %v1930, 1
        %v1932 = vadd.f32 %v1930, %v1931
        %v1933 = vmul.f32 %v1895, %v1895
        %v1934 = vmul.f32 %v1896, %v1896
        %v1935 = vmul.f32 %v1897, %v1897
        %v1936 = vmul.f32 %v1898, %v1898
        %v1937 = vmul.f32 %v1899, %v1899
        %v1938 = vmul.f32 %v1900, %v1900
        %v1939 = vmul.f32 %v1901, %v1901
        %v1940 = vmul.f32 %v1902, %v1902
        %v1941 = vsel %vm439, %v1933, 0.0
        %v1942 = vsel %vm439, %v1934, 0.0
        %v1943 = vadd.f32 %v1941, %v1942
        %v1944 = vsel %vm439, %v1935, 0.0
        %v1945 = vadd.f32 %v1943, %v1944
        %v1946 = vsel %vm439, %v1936, 0.0
        %v1947 = vadd.f32 %v1945, %v1946
        %v1948 = vsel %vm439, %v1937, 0.0
        %v1949 = vadd.f32 %v1947, %v1948
        %v1950 = vsel %vm439, %v1938, 0.0
        %v1951 = vadd.f32 %v1949, %v1950
        %v1952 = vsel %vm439, %v1939, 0.0
        %v1953 = vadd.f32 %v1951, %v1952
        %v1954 = vsel %vm439, %v1940, 0.0
        %v1955 = vadd.f32 %v1953, %v1954
        %v1956 = vrot.slane %v1955, 4
        %v1957 = vadd.f32 %v1955, %v1956
        %v1958 = vrot.slane %v1957, 2
        %v1959 = vadd.f32 %v1957, %v1958
        %v1960 = vrot.slane %v1959, 1
        %v1961 = vadd.f32 %v1959, %v1960
        %v1962 = vadd.f32 %v1689, %v1932
        %v1963 = vadd.f32 %v1718, %v1961
        %vm1964 = vcmask 57344
        %1965 = vst.msk [vmem:[%s200] sm:$0x1] %vm1964, %v1962
        %1966 = vst.msk [vmem:[%s200 + $0x1] sm:$0x1] %vm1964, %v1963
        %s1967 = sand.u32 %s92, 1
        %s1968 = scalar_lea.sflag [#allocation3], %s1967
        %s1969 = sand.u32 %s92, 1
        %s1970 = smul.addr %s1969, 128
        %s1971 = scalar_lea.vmem [#allocation2], %s1970
        %s1972 = sand.u32 %s120, 1
        %s1973 = scalar_lea.sflag [#allocation5], %s1972
        %s1974 = sand.u32 %s120, 1
        %s1975 = smul.addr %s1974, 2
        %s1976 = scalar_lea.vmem [#allocation4], %s1975
        // Predicated region
        $region29: #{tpu_custom_call.1} parent=27 // pred_check
          %p1977 = pneg %p102
        $region30: #{tpu_custom_call.1} parent=27 // pred_check_branch
          %1979 = sbr.rel (%p1977) target = $region32
        $region31: #{tpu_custom_call.1} parent=27 // pred_region
          %s1980 = smul.u32 8, %s26
          %s1982 = ssub.s32 2048, 2048
          %1983 = vsyncadd %s1968, %s1982
          %s1984 = smul.addr %s1980, 2
          %s1985 = smul.addr %s25, 16
          %s1986 = sadd.s32 %s1984, %s1985
          %s1987 = smul.addr %s1986, 128
          %s1988 = scalar_lea.hbm %s2, %s1987
          %s1989 = sshll.u32 %s1971, 4
          %s1990 = int_to_ptr.vmem [resolvable:$true] %s1989
          %1995 = dma.vmem_to_hbm [thread:$0]  %s1990, 2048, %s1988, %s1968, 128, 128, 8
        $region32: #{tpu_custom_call.1} parent=27 // pred_fallthru
          _
        // Predicated region
        $region33: #{tpu_custom_call.1} parent=27 // pred_check
          %p1996 = pneg %p130
        $region34: #{tpu_custom_call.1} parent=27 // pred_check_branch
          %1998 = sbr.rel (%p1996) target = $region36
        $region35: #{tpu_custom_call.1} parent=27 // pred_region
          %s2000 = ssub.s32 32, 32
          %2001 = vsyncadd %s1973, %s2000
          %s2002 = sadd.s32 %s26, %s25
          %s2003 = smul.addr %s2002, 32
          %s2004 = scalar_lea.hbm %s3, %s2003
          %s2006 = sshll.u32 %s1976, 4
          %s2007 = int_to_ptr.vmem [resolvable:$true] %s2006
          %2009 = dma.vmem_to_hbm [thread:$0]  %s2007, 32, %s2004, %s1973
        $region36: #{tpu_custom_call.1} parent=27 // pred_fallthru
          _
      $region28: #{tpu_custom_call.1} parent=5 // pred_fallthru
        _
      %p2010 = scmp.le.s32.totalorder 2, %s16
      // Predicated region
      $region37: #{tpu_custom_call.1} parent=5 // pred_check
        %p2011 = pneg %p2010
      $region38: #{tpu_custom_call.1} parent=5 // pred_check_branch
        %2013 = sbr.rel (%p2011) target = $region40
      $region39: #{tpu_custom_call.1} parent=5 // pred_region
        %s2014 = ssub.s32 %s16, 2
        // Predicated region
        $region41: #{tpu_custom_call.1} parent=39 // pred_check
          %p2015 = pneg %p108
        $region42: #{tpu_custom_call.1} parent=39 // pred_check_branch
          %2017 = sbr.rel (%p2015) target = $region44
        $region43: #{tpu_custom_call.1} parent=39 // pred_region
          %s2018 = sand.u32 %s93, 1
          %s2019 = scalar_lea.sflag [#allocation3], %s2018
          %s2020 = sand.u32 %s93, 1
          %s2021 = smul.addr %s2020, 128
          %s2022 = scalar_lea.vmem [#allocation2], %s2021
          %2023 = dma.done %s2019, 2048
        $region44: #{tpu_custom_call.1} parent=39 // pred_fallthru
          _
        // Predicated region
        $region45: #{tpu_custom_call.1} parent=39 // pred_check
          %p2024 = pneg %p136
        $region46: #{tpu_custom_call.1} parent=39 // pred_check_branch
          %2026 = sbr.rel (%p2024) target = $region48
        $region47: #{tpu_custom_call.1} parent=39 // pred_region
          %s2027 = sand.u32 %s121, 1
          %s2028 = scalar_lea.sflag [#allocation5], %s2027
          %s2029 = sand.u32 %s121, 1
          %s2030 = smul.addr %s2029, 2
          %s2031 = scalar_lea.vmem [#allocation4], %s2030
          %2032 = dma.done %s2028, 32
        $region48: #{tpu_custom_call.1} parent=39 // pred_fallthru
          _
      $region40: #{tpu_custom_call.1} parent=5 // pred_fallthru
        _
    $region6: #{tpu_custom_call.1} parent=1 // loop_footer
      %s20 = sadd.s32 1, %s16
    $region7: #{tpu_custom_call.1} parent=1 // loop_footer_branch
      %15 = sbr.rel target = $region3
    $region8: #{tpu_custom_call.1} parent=1 // loop_exit
      _
    %2033 = vsyncpa [#allocation3], 1
    %s2034 = scalar_lea.sflag [#allocation3], 1
    %2035 = vsyncpa %s2034, 1
    %2036 = vsyncpa [#allocation5], 1
    %s2037 = scalar_lea.sflag [#allocation5], 1
    %2038 = vsyncpa %s2037, 1

</llo_original>
